<compile_context>
chip_gen: v6e
topology: v6e:2x2x1
jax: 0.10.0
libtpu: 0.0.40
codegen_flags: <defaults>
</compile_context>

<pallas_src>
import jax
import jax.numpy as jnp
from jax.experimental import pallas as pl
from jax.experimental.pallas import tpu as pltpu


COMPUTE_DTYPE = jnp.bfloat16
LANE = 128          # lane-dim padding quantum
NODE_TILE = 256     # TM = TK: MXU-friendly on v6e/v7x (2x256^2), = 2x128 on v5e


def _round_up(x, m):
    return (x + m - 1) // m * m


def _pad2(a, rows, cols, dtype):
    out = jnp.zeros((rows, cols), dtype)
    return out.at[: a.shape[0], : a.shape[1]].set(a.astype(dtype))


# -----------------------------------------------------------------------------
# Kernel 1:  G = relu(A @ X @ W1 + b1) @ W2
# grid = (row tiles, A-column tiles); axis 1 is the reduction (innermost).
# -----------------------------------------------------------------------------
def _encode_kernel(a_ref, x_ref, w1_ref, b1_ref, w2_ref, g_ref, ax_acc):
    k = pl.program_id(1)

    @pl.when(k == 0)
    def _():
        ax_acc[...] = jnp.zeros_like(ax_acc)

    # dominant N^2 term, bf16 operands, f32 accumulation
    ax_acc[...] += jnp.dot(a_ref[...], x_ref[...],
                           preferred_element_type=jnp.float32)

    @pl.when(k == pl.num_programs(1) - 1)
    def _():
        h = jnp.dot(ax_acc[...].astype(w1_ref.dtype), w1_ref[...],
                    preferred_element_type=jnp.float32) + b1_ref[...]
        h = jnp.maximum(h, 0.0)
        g_ref[...] = jnp.dot(h.astype(w2_ref.dtype), w2_ref[...],
                             preferred_element_type=jnp.float32).astype(g_ref.dtype)


# -----------------------------------------------------------------------------
# Kernel 2:  out = relu(relu(A @ G + b2) @ W3 + b3) @ W4 + b4
# -----------------------------------------------------------------------------
def _decode_kernel(a_ref, g_ref, b2_ref, w3_ref, b3_ref, w4_ref, b4_ref,
                   out_ref, acc):
    k = pl.program_id(1)

    @pl.when(k == 0)
    def _():
        acc[...] = jnp.zeros_like(acc)

    acc[...] += jnp.dot(a_ref[...], g_ref[...],
                        preferred_element_type=jnp.float32)

    @pl.when(k == pl.num_programs(1) - 1)
    def _():
        z = jnp.maximum(acc[...] + b2_ref[...], 0.0)
        z = jnp.dot(z.astype(w3_ref.dtype), w3_ref[...],
                    preferred_element_type=jnp.float32) + b3_ref[...]
        z = jnp.maximum(z, 0.0)
        out_ref[...] = (jnp.dot(z.astype(w4_ref.dtype), w4_ref[...],
                                preferred_element_type=jnp.float32)
                        + b4_ref[...]).astype(out_ref.dtype)


# -----------------------------------------------------------------------------
# Graph glue (plain JAX): dense symmetric-normalized adjacency, PyG-style.
# -----------------------------------------------------------------------------
def normalized_adjacency(edge_index, num_nodes):
    """A_hat = D^-1/2 (A + I) D^-1/2, self-loops added, messages src->dst."""
    src = edge_index[0]
    dst = edge_index[1]
    loop = jnp.arange(num_nodes, dtype=src.dtype)
    src = jnp.concatenate([src, loop])
    dst = jnp.concatenate([dst, loop])
    A = jnp.zeros((num_nodes, num_nodes), jnp.float32).at[dst, src].add(1.0)
    deg = A.sum(axis=1)
    dinv = jnp.where(deg > 0.0, 1.0 / jnp.sqrt(deg), 0.0)
    return A * dinv[:, None] * dinv[None, :]


# -----------------------------------------------------------------------------
# Wrapper: pad to TPU-friendly shapes, run the two pipelined pallas_calls.
# -----------------------------------------------------------------------------
def graph_autoencoder(x, edge_index, params):
    n, f = x.shape
    h = params["w1"].shape[1]
    o = params["w2"].shape[1]

    # padded / tiled geometry
    n_pad = _round_up(max(n, NODE_TILE), NODE_TILE)
    fp = _round_up(f, LANE)
    hp = _round_up(h, LANE)
    op = _round_up(o, LANE)
    tm = NODE_TILE
    tk = NODE_TILE
    grid = (n_pad // tm, n_pad // tk)

    # bf16 for the big operands (A, X, weights); f32 for biases (added post-acc)
    a_pad = _pad2(normalized_adjacency(edge_index, n), n_pad, n_pad, COMPUTE_DTYPE)
    x_pad = _pad2(x, n_pad, fp, COMPUTE_DTYPE)
    w1 = _pad2(params["w1"], fp, hp, COMPUTE_DTYPE)
    w2 = _pad2(params["w2"], hp, op, COMPUTE_DTYPE)
    w3 = _pad2(params["w3"], op, hp, COMPUTE_DTYPE)
    w4 = _pad2(params["w4"], hp, fp, COMPUTE_DTYPE)
    b1 = _pad2(params["b1"], 1, hp, jnp.float32)
    b2 = _pad2(params["b2"], 1, op, jnp.float32)
    b3 = _pad2(params["b3"], 1, hp, jnp.float32)
    b4 = _pad2(params["b4"], 1, fp, jnp.float32)

    compiler_params = pltpu.CompilerParams(
        dimension_semantics=("parallel", "arbitrary"),
        vmem_limit_bytes=32 * 1024 * 1024,
    )

    # ---------------- kernel 1: G = relu(A @ X @ W1 + b1) @ W2 ----------------
    cost1 = pl.CostEstimate(
        flops=2 * n_pad * n_pad * fp + 2 * n_pad * (fp * hp + hp * op),
        transcendentals=0,
        bytes_accessed=(n_pad * n_pad * 2                      # A (bf16)
                        + grid[0] * n_pad * fp * 2             # X re-read per row tile
                        + (fp * hp + hp * op) * 2 + hp * 4     # W1, W2, b1
                        + n_pad * op * 2),                     # G out
    )
    g = pl.pallas_call(
        _encode_kernel,
        out_shape=jax.ShapeDtypeStruct((n_pad, op), COMPUTE_DTYPE),
        grid_spec=pltpu.PrefetchScalarGridSpec(
            num_scalar_prefetch=0,
            grid=grid,
            in_specs=[
                pl.BlockSpec((tm, tk), lambda i, k: (i, k)),   # A_hat tile
                pl.BlockSpec((tk, fp), lambda i, k: (k, 0)),   # X row-block
                pl.BlockSpec((fp, hp), lambda i, k: (0, 0)),   # W1 (resident)
                pl.BlockSpec((1, hp), lambda i, k: (0, 0)),    # b1 (resident)
                pl.BlockSpec((hp, op), lambda i, k: (0, 0)),   # W2 (resident)
            ],
            out_specs=pl.BlockSpec((tm, op), lambda i, k: (i, 0)),
            scratch_shapes=[pltpu.VMEM((tm, fp), jnp.float32)],
        ),
        compiler_params=compiler_params,
        cost_estimate=cost1,
    )(a_pad, x_pad, w1, b1, w2)

    # ------- kernel 2: out = relu(relu(A @ G + b2) @ W3 + b3) @ W4 + b4 -------
    cost2 = pl.CostEstimate(
        flops=2 * n_pad * n_pad * op + 2 * n_pad * (op * hp + hp * fp),
        transcendentals=0,
        bytes_accessed=(n_pad * n_pad * 2                      # A (bf16)
                        + grid[0] * n_pad * op * 2             # G re-read per row tile
                        + (op * hp + hp * fp) * 2              # W3, W4
                        + (op + hp + fp) * 4                   # b2, b3, b4
                        + n_pad * fp * 4),                     # out (f32)
    )
    out = pl.pallas_call(
        _decode_kernel,
        out_shape=jax.ShapeDtypeStruct((n_pad, fp), jnp.float32),
        grid_spec=pltpu.PrefetchScalarGridSpec(
            num_scalar_prefetch=0,
            grid=grid,
            in_specs=[
                pl.BlockSpec((tm, tk), lambda i, k: (i, k)),   # A_hat tile
                pl.BlockSpec((tk, op), lambda i, k: (k, 0)),   # G row-block
                pl.BlockSpec((1, op), lambda i, k: (0, 0)),    # b2
                pl.BlockSpec((op, hp), lambda i, k: (0, 0)),   # W3
                pl.BlockSpec((1, hp), lambda i, k: (0, 0)),    # b3
                pl.BlockSpec((hp, fp), lambda i, k: (0, 0)),   # W4
                pl.BlockSpec((1, fp), lambda i, k: (0, 0)),    # b4
            ],
            out_specs=pl.BlockSpec((tm, fp), lambda i, k: (i, 0)),
            scratch_shapes=[pltpu.VMEM((tm, op), jnp.float32)],
        ),
        compiler_params=compiler_params,
        cost_estimate=cost2,
    )(a_pad, g, b2, w3, b3, w4, b4)

    return out[:n, :f]


# -----------------------------------------------------------------------------
# Parameters + pure-JAX reference (f32) for the correctness check.
# -----------------------------------------------------------------------------
def init_params(key, num_features, hidden_channels, out_channels):
    """GCNConv / Linear weights stored pre-transposed as [in, out]."""
    ks = jax.random.split(key, 8)
    sc = 0.1
    return {
        "w1": sc * jax.random.normal(ks[0], (num_features, hidden_channels), jnp.float32),
        "b1": sc * jax.random.normal(ks[1], (1, hidden_channels), jnp.float32),
        "w2": sc * jax.random.normal(ks[2], (hidden_channels, out_channels), jnp.float32),
        "b2": sc * jax.random.normal(ks[3], (1, out_channels), jnp.float32),
        "w3": sc * jax.random.normal(ks[4], (out_channels, hidden_channels), jnp.float32),
        "b3": sc * jax.random.normal(ks[5], (1, hidden_channels), jnp.float32),
        "w4": sc * jax.random.normal(ks[6], (hidden_channels, num_features), jnp.float32),
        "b4": sc * jax.random.normal(ks[7], (1, num_features), jnp.float32),
    }


def reference_forward(x, edge_index, params):
    a_hat = normalized_adjacency(edge_index, x.shape[0])
    h = jnp.maximum(a_hat @ (x @ params["w1"]) + params["b1"], 0.0)
    h = jnp.maximum(a_hat @ (h @ params["w2"]) + params["b2"], 0.0)
    h = jnp.maximum(h @ params["w3"] + params["b3"], 0.0)
    return h @ params["w4"] + params["b4"]


if __name__ == "__main__":
    num_nodes = 16
    num_features = 8
    hidden_channels = 32
    out_channels = 16
    num_edges = 24

    key = jax.random.PRNGKey(0)
    k_x, k_e, k_p = jax.random.split(key, 3)

    x = jax.random.normal(k_x, (num_nodes, num_features), jnp.float32)
    edge_index = jax.random.randint(k_e, (2, num_edges), 0, num_nodes, jnp.int32)
    params = init_params(k_p, num_features, hidden_channels, out_channels)

    x_hat = graph_autoencoder(x, edge_index, params)
    jax.block_until_ready(x_hat)

    ref = reference_forward(x, edge_index, params)
    assert x_hat.shape == (num_nodes, num_features)
    # bf16 operands with f32 accumulation -> compare against f32 reference loosely
    assert jnp.allclose(x_hat, ref, atol=2e-2, rtol=2e-2), (
        float(jnp.max(jnp.abs(x_hat - ref))))

    print("KERNEL_OK")
</pallas_src>

<mosaic_0001>
module attributes {stable_mosaic.version = 11 : i64} {
  func.func @_encode_kernel(%arg0: i32, %arg1: i32, %arg2: memref<256x256xbf16, #tpu.memory_space<vmem>>, %arg3: memref<256x128xbf16, #tpu.memory_space<vmem>>, %arg4: memref<128x128xbf16, #tpu.memory_space<vmem>>, %arg5: memref<1x128xf32, #tpu.memory_space<vmem>>, %arg6: memref<128x128xbf16, #tpu.memory_space<vmem>>, %arg7: memref<256x128xbf16, #tpu.memory_space<vmem>>, %arg8: memref<256x128xf32, #tpu.memory_space<vmem>>) attributes {dimension_semantics = [#tpu.dimension_semantics<parallel>, #tpu.dimension_semantics<arbitrary>], iteration_bounds = array<i64: 1, 1>, scalar_prefetch = 0 : i64, scratch_operands = 1 : i64, tpu.core_type = #tpu.core_type<tc>, window_params = [{transform_indices = @transform_0, window_bounds = array<i64: 256, 256>}, {transform_indices = @transform_1, window_bounds = array<i64: 256, 128>}, {pipeline_mode = #tpu.pipeline_mode<synchronous>, transform_indices = @transform_2, window_bounds = array<i64: 128, 128>}, {pipeline_mode = #tpu.pipeline_mode<synchronous>, transform_indices = @transform_3, window_bounds = array<i64: 1, 128>}, {pipeline_mode = #tpu.pipeline_mode<synchronous>, transform_indices = @transform_4, window_bounds = array<i64: 128, 128>}, {transform_indices = @transform_5, window_bounds = array<i64: 256, 128>}]} {
    %c0_i32 = arith.constant 0 : i32
    %0 = arith.cmpi eq, %arg1, %c0_i32 : i32
    %1 = arith.extui %0 : i1 to i32
    %c0_i32_0 = arith.constant 0 : i32
    %2 = arith.cmpi ne, %1, %c0_i32_0 : i32
    scf.if %2 {
      %cst_10 = arith.constant 0.000000e+00 : f32
      %12 = vector.broadcast %cst_10 : f32 to vector<256x128xf32>
      %c0_11 = arith.constant 0 : index
      %c0_12 = arith.constant 0 : index
      %13 = vector.load %arg8[%c0_11, %c0_12] : memref<256x128xf32, #tpu.memory_space<vmem>>, vector<256x128xf32>
      tpu.vector_store %arg8[%c0_11, %c0_12], %12 {strides = array<i32>} : memref<256x128xf32, #tpu.memory_space<vmem>>, vector<256x128xf32>,
    } else {
    }
    %c0 = arith.constant 0 : index
    %c0_1 = arith.constant 0 : index
    %3 = vector.load %arg8[%c0, %c0_1] : memref<256x128xf32, #tpu.memory_space<vmem>>, vector<256x128xf32>
    %c0_2 = arith.constant 0 : index
    %c0_3 = arith.constant 0 : index
    %4 = vector.load %arg2[%c0_2, %c0_3] : memref<256x256xbf16, #tpu.memory_space<vmem>>, vector<256x256xbf16>
    %c0_4 = arith.constant 0 : index
    %c0_5 = arith.constant 0 : index
    %5 = vector.load %arg3[%c0_4, %c0_5] : memref<256x128xbf16, #tpu.memory_space<vmem>>, vector<256x128xbf16>
    %cst = arith.constant dense<0.000000e+00> : vector<256x128xf32>
    %6 = tpu.matmul %4, %5, %cst {dimension_numbers = #tpu.dot_dimension_numbers<[1], [0], [0], [1], [0, 0, 1, 1], [], []>} : vector<256x256xbf16>, vector<256x128xbf16>, vector<256x128xf32> -> vector<256x128xf32>
    %7 = arith.addf %3, %6 : vector<256x128xf32>
    %c0_6 = arith.constant 0 : index
    %c0_7 = arith.constant 0 : index
    %8 = vector.load %arg8[%c0_6, %c0_7] : memref<256x128xf32, #tpu.memory_space<vmem>>, vector<256x128xf32>
    tpu.vector_store %arg8[%c0_6, %c0_7], %7 {strides = array<i32>} : memref<256x128xf32, #tpu.memory_space<vmem>>, vector<256x128xf32>,
    %c0_i32_8 = arith.constant 0 : i32
    %9 = arith.cmpi eq, %arg1, %c0_i32_8 : i32
    %10 = arith.extui %9 : i1 to i32
    %c0_i32_9 = arith.constant 0 : i32
    %11 = arith.cmpi ne, %10, %c0_i32_9 : i32
    scf.if %11 {
      %c0_10 = arith.constant 0 : index
      %c0_11 = arith.constant 0 : index
      %12 = vector.load %arg8[%c0_10, %c0_11] : memref<256x128xf32, #tpu.memory_space<vmem>>, vector<256x128xf32>
      %13 = arith.truncf %12 : vector<256x128xf32> to vector<256x128xbf16>
      %c0_12 = arith.constant 0 : index
      %c0_13 = arith.constant 0 : index
      %14 = vector.load %arg4[%c0_12, %c0_13] : memref<128x128xbf16, #tpu.memory_space<vmem>>, vector<128x128xbf16>
      %cst_14 = arith.constant dense<0.000000e+00> : vector<256x128xf32>
      %15 = tpu.matmul %13, %14, %cst_14 {dimension_numbers = #tpu.dot_dimension_numbers<[1], [0], [0], [1], [0, 0, 1, 1], [], []>} : vector<256x128xbf16>, vector<128x128xbf16>, vector<256x128xf32> -> vector<256x128xf32>
      %c0_15 = arith.constant 0 : index
      %c0_16 = arith.constant 0 : index
      %16 = vector.load %arg5[%c0_15, %c0_16] : memref<1x128xf32, #tpu.memory_space<vmem>>, vector<1x128xf32>
      %17 = vector.broadcast %16 : vector<1x128xf32> to vector<256x128xf32>
      %18 = arith.addf %15, %17 : vector<256x128xf32>
      %cst_17 = arith.constant 0.000000e+00 : f32
      %19 = vector.broadcast %cst_17 : f32 to vector<256x128xf32>
      %20 = arith.maximumf %18, %19 : vector<256x128xf32>
      %21 = arith.truncf %20 : vector<256x128xf32> to vector<256x128xbf16>
      %c0_18 = arith.constant 0 : index
      %c0_19 = arith.constant 0 : index
      %22 = vector.load %arg6[%c0_18, %c0_19] : memref<128x128xbf16, #tpu.memory_space<vmem>>, vector<128x128xbf16>
      %cst_20 = arith.constant dense<0.000000e+00> : vector<256x128xf32>
      %23 = tpu.matmul %21, %22, %cst_20 {dimension_numbers = #tpu.dot_dimension_numbers<[1], [0], [0], [1], [0, 0, 1, 1], [], []>} : vector<256x128xbf16>, vector<128x128xbf16>, vector<256x128xf32> -> vector<256x128xf32>
      %24 = arith.truncf %23 : vector<256x128xf32> to vector<256x128xbf16>
      %c0_21 = arith.constant 0 : index
      %c0_22 = arith.constant 0 : index
      %25 = vector.load %arg7[%c0_21, %c0_22] : memref<256x128xbf16, #tpu.memory_space<vmem>>, vector<256x128xbf16>
      tpu.vector_store %arg7[%c0_21, %c0_22], %24 {strides = array<i32>} : memref<256x128xbf16, #tpu.memory_space<vmem>>, vector<256x128xbf16>,
    } else {
    }
    return
  }
  func.func @transform_0(%arg0: i32, %arg1: i32) -> (i32, i32) {
    %c0_i32 = arith.constant 0 : i32
    return %arg0, %arg1 : i32, i32
  }
  func.func @transform_1(%arg0: i32, %arg1: i32) -> (i32, i32) {
    %c0_i32 = arith.constant 0 : i32
    %c0_i32_0 = arith.constant 0 : i32
    return %arg1, %c0_i32 : i32, i32
  }
  func.func @transform_2(%arg0: i32, %arg1: i32) -> (i32, i32) {
    %c0_i32 = arith.constant 0 : i32
    %c0_i32_0 = arith.constant 0 : i32
    %c0_i32_1 = arith.constant 0 : i32
    return %c0_i32, %c0_i32_0 : i32, i32
  }
  func.func @transform_3(%arg0: i32, %arg1: i32) -> (i32, i32) {
    %c0_i32 = arith.constant 0 : i32
    %c0_i32_0 = arith.constant 0 : i32
    %c0_i32_1 = arith.constant 0 : i32
    return %c0_i32, %c0_i32_0 : i32, i32
  }
  func.func @transform_4(%arg0: i32, %arg1: i32) -> (i32, i32) {
    %c0_i32 = arith.constant 0 : i32
    %c0_i32_0 = arith.constant 0 : i32
    %c0_i32_1 = arith.constant 0 : i32
    return %c0_i32, %c0_i32_0 : i32, i32
  }
  func.func @transform_5(%arg0: i32, %arg1: i32) -> (i32, i32) {
    %c0_i32 = arith.constant 0 : i32
    %c0_i32_0 = arith.constant 0 : i32
    return %arg0, %c0_i32 : i32, i32
  }
}

</mosaic_0001>

<llo_original>
// kernel: tpu_custom_call.1
$region0: #{tpu_custom_call.1}
  #allocation0 [shape = 'u32[]', space=smem, size = 0x4, offset = 0x4, fixed_abs, tag = 'smem constant byte address 0x4 - core index']
  #allocation1 [shape = 'u32[144,128]{1,0:T(1,128)}', space=vmem, size = 0x12000, scoped, tag = 'internal scratch']
  #allocation2 [shape = 'f32[256,128]{1,0:T(8,128)}', space=vmem, size = 0x20000, scoped, tag = 'scratch operand']
  %s0 = inlined_call_operand.hbm [shape: bf16[256,256], index: 0, kind: input, shape index: {}]
  %s1 = inlined_call_operand.hbm [shape: bf16[256,128], index: 1, kind: input, shape index: {}]
  %s2 = inlined_call_operand.hbm [shape: bf16[128,128], index: 2, kind: input, shape index: {}]
  %s3 = inlined_call_operand.vmem [shape: f32[1,128], index: 3, kind: input, shape index: {}]
  %s4 = inlined_call_operand.hbm [shape: bf16[128,128], index: 4, kind: input, shape index: {}]
  %s5 = inlined_call_operand.hbm [shape: bf16[256,128], index: 5, kind: output, shape index: {}]
  %s6 = sld [smem:[#allocation0]]
  $region54: #{tpu_custom_call.1} parent=0
    _
  %s8 = ssub.s32 1, %s6
  %s9 = scalar_select 0, %s8, %s6
  $region1: #{tpu_custom_call.1} parent=0
    #allocation3 [shape = 'u8[131072]{0}', space=vmem, size = 0x20000, scoped, tag = 'input window, operand 0, single buffered']
    #allocation4 [shape = 's32[1]{0}', space=sflag, size = 0x4, scoped, tag = 'scoped memory for tpu_custom_call.1']
    #allocation5 [shape = 's32[1]{0}', space=sflag, size = 0x4, scoped, tag = 'scoped memory for tpu_custom_call.1']
    #allocation6 [shape = 'u8[65536]{0}', space=vmem, size = 0x10000, scoped, tag = 'input window, operand 1, single buffered']
    #allocation7 [shape = 's32[1]{0}', space=sflag, size = 0x4, scoped, tag = 'scoped memory for tpu_custom_call.1']
    #allocation8 [shape = 'u8[32768]{0}', space=vmem, size = 0x8000, scoped, tag = 'input window, operand 2, single buffered']
    #allocation9 [shape = 'u8[32768]{0}', space=vmem, size = 0x8000, scoped, tag = 'input window, operand 4, single buffered']
    #allocation10 [shape = 's32[1]{0}', space=sflag, size = 0x4, scoped, tag = 'scoped memory for tpu_custom_call.1']
    #allocation11 [shape = 'u8[65536]{0}', space=vmem, size = 0x10000, scoped, tag = 'output window, operand 0, single buffered']
    %10 = vsyncpa [#allocation4], 0
    %11 = vsyncpa [#allocation7], 0
    %12 = vsyncpa [#allocation10], 0
    %13 = vsyncpa [#allocation5], 0
    // Predicated region
    $region2: #{tpu_custom_call.1} parent=1 // pred_check
      _
    $region3: #{tpu_custom_call.1} parent=1 // pred_check_branch
      %15 = sbr.rel (0) target = $region5
    $region4: #{tpu_custom_call.1} parent=1 // pred_region
      %s17 = ssub.s32 4096, 4096
      %18 = vsyncadd [#allocation4], %s17
      %s19 = sshll.u32 [#allocation3], 4
      %s20 = int_to_ptr.vmem [resolvable:$true] %s19
      %25 = dma.hbm_to_vmem [thread:$0]  %s0, 4096, %s20, [#allocation4], 128, 128, 8
    $region5: #{tpu_custom_call.1} parent=1 // pred_fallthru
      _
    // Predicated region
    $region6: #{tpu_custom_call.1} parent=1 // pred_check
      _
    $region7: #{tpu_custom_call.1} parent=1 // pred_check_branch
      %27 = sbr.rel (0) target = $region9
    $region8: #{tpu_custom_call.1} parent=1 // pred_region
      %s29 = ssub.s32 2048, 2048
      %30 = vsyncadd [#allocation7], %s29
      %s31 = sshll.u32 [#allocation6], 4
      %s32 = int_to_ptr.vmem [resolvable:$true] %s31
      %37 = dma.hbm_to_vmem [thread:$0]  %s1, 2048, %s32, [#allocation7], 64, 64, 4
    $region9: #{tpu_custom_call.1} parent=1 // pred_fallthru
      _
    // Predicated region
    $region10: #{tpu_custom_call.1} parent=1 // pred_check
      _
    $region11: #{tpu_custom_call.1} parent=1 // pred_check_branch
      %39 = sbr.rel (0) target = $region13
    $region12: #{tpu_custom_call.1} parent=1 // pred_region
      %s41 = ssub.s32 1024, 1024
      %42 = vsyncadd [#allocation7], %s41
      %s43 = sshll.u32 [#allocation8], 4
      %s44 = int_to_ptr.vmem [resolvable:$true] %s43
      %49 = dma.hbm_to_vmem [thread:$0]  %s2, 1024, %s44, [#allocation7], 64, 64, 4
    $region13: #{tpu_custom_call.1} parent=1 // pred_fallthru
      _
    // Predicated region
    $region14: #{tpu_custom_call.1} parent=1 // pred_check
      _
    $region15: #{tpu_custom_call.1} parent=1 // pred_check_branch
      %51 = sbr.rel (0) target = $region17
    $region16: #{tpu_custom_call.1} parent=1 // pred_region
      _
    $region17: #{tpu_custom_call.1} parent=1 // pred_fallthru
      _
    // Predicated region
    $region18: #{tpu_custom_call.1} parent=1 // pred_check
      _
    $region19: #{tpu_custom_call.1} parent=1 // pred_check_branch
      %53 = sbr.rel (0) target = $region21
    $region20: #{tpu_custom_call.1} parent=1 // pred_region
      %s55 = ssub.s32 1024, 1024
      %56 = vsyncadd [#allocation10], %s55
      %s57 = sshll.u32 [#allocation9], 4
      %s58 = int_to_ptr.vmem [resolvable:$true] %s57
      %63 = dma.hbm_to_vmem [thread:$0]  %s4, 1024, %s58, [#allocation10], 64, 64, 4
    $region21: #{tpu_custom_call.1} parent=1 // pred_fallthru
      _
    // Predicated region
    $region22: #{tpu_custom_call.1} parent=1 // pred_check
      _
    $region23: #{tpu_custom_call.1} parent=1 // pred_check_branch
      %65 = sbr.rel (0) target = $region25
    $region24: #{tpu_custom_call.1} parent=1 // pred_region
      %66 = dma.done [#allocation4], 4096
    $region25: #{tpu_custom_call.1} parent=1 // pred_fallthru
      _
    // Predicated region
    $region26: #{tpu_custom_call.1} parent=1 // pred_check
      _
    $region27: #{tpu_custom_call.1} parent=1 // pred_check_branch
      %68 = sbr.rel (0) target = $region29
    $region28: #{tpu_custom_call.1} parent=1 // pred_region
      %69 = dma.done [#allocation7], 2048
    $region29: #{tpu_custom_call.1} parent=1 // pred_fallthru
      _
    // Predicated region
    $region30: #{tpu_custom_call.1} parent=1 // pred_check
      _
    $region31: #{tpu_custom_call.1} parent=1 // pred_check_branch
      %71 = sbr.rel (0) target = $region33
    $region32: #{tpu_custom_call.1} parent=1 // pred_region
      %72 = dma.done [#allocation7], 1024
    $region33: #{tpu_custom_call.1} parent=1 // pred_fallthru
      _
    // Predicated region
    $region34: #{tpu_custom_call.1} parent=1 // pred_check
      _
    $region35: #{tpu_custom_call.1} parent=1 // pred_check_branch
      %74 = sbr.rel (0) target = $region37
    $region36: #{tpu_custom_call.1} parent=1 // pred_region
      %75 = dma.done [#allocation10], 1024
    $region37: #{tpu_custom_call.1} parent=1 // pred_fallthru
      _
    %p77 = scmp.eq.s32.totalorder 0, 0
    // Predicated region
    $region38: #{tpu_custom_call.1} parent=1 // pred_check
      %p78 = pneg %p77
    $region39: #{tpu_custom_call.1} parent=1 // pred_check_branch
      %80 = sbr.rel (%p78) target = $region41
    $region40: #{tpu_custom_call.1} parent=1 // pred_region
      %81 = vst [vmem:[#allocation2] sm:$0xff] 0.0
      %82 = vst [vmem:[#allocation2 + $0x8] sm:$0xff] 0.0
      %83 = vst [vmem:[#allocation2 + $0x10] sm:$0xff] 0.0
      %84 = vst [vmem:[#allocation2 + $0x18] sm:$0xff] 0.0
      %85 = vst [vmem:[#allocation2 + $0x20] sm:$0xff] 0.0
      %86 = vst [vmem:[#allocation2 + $0x28] sm:$0xff] 0.0
      %87 = vst [vmem:[#allocation2 + $0x30] sm:$0xff] 0.0
      %88 = vst [vmem:[#allocation2 + $0x38] sm:$0xff] 0.0
      %89 = vst [vmem:[#allocation2 + $0x40] sm:$0xff] 0.0
      %90 = vst [vmem:[#allocation2 + $0x48] sm:$0xff] 0.0
      %91 = vst [vmem:[#allocation2 + $0x50] sm:$0xff] 0.0
      %92 = vst [vmem:[#allocation2 + $0x58] sm:$0xff] 0.0
      %93 = vst [vmem:[#allocation2 + $0x60] sm:$0xff] 0.0
      %94 = vst [vmem:[#allocation2 + $0x68] sm:$0xff] 0.0
      %95 = vst [vmem:[#allocation2 + $0x70] sm:$0xff] 0.0
      %96 = vst [vmem:[#allocation2 + $0x78] sm:$0xff] 0.0
      %97 = vst [vmem:[#allocation2 + $0x80] sm:$0xff] 0.0
      %98 = vst [vmem:[#allocation2 + $0x88] sm:$0xff] 0.0
      %99 = vst [vmem:[#allocation2 + $0x90] sm:$0xff] 0.0
      %100 = vst [vmem:[#allocation2 + $0x98] sm:$0xff] 0.0
      %101 = vst [vmem:[#allocation2 + $0xa0] sm:$0xff] 0.0
      %102 = vst [vmem:[#allocation2 + $0xa8] sm:$0xff] 0.0
      %103 = vst [vmem:[#allocation2 + $0xb0] sm:$0xff] 0.0
      %104 = vst [vmem:[#allocation2 + $0xb8] sm:$0xff] 0.0
      %105 = vst [vmem:[#allocation2 + $0xc0] sm:$0xff] 0.0
      %106 = vst [vmem:[#allocation2 + $0xc8] sm:$0xff] 0.0
      %107 = vst [vmem:[#allocation2 + $0xd0] sm:$0xff] 0.0
      %108 = vst [vmem:[#allocation2 + $0xd8] sm:$0xff] 0.0
      %109 = vst [vmem:[#allocation2 + $0xe0] sm:$0xff] 0.0
      %110 = vst [vmem:[#allocation2 + $0xe8] sm:$0xff] 0.0
      %111 = vst [vmem:[#allocation2 + $0xf0] sm:$0xff] 0.0
      %112 = vst [vmem:[#allocation2 + $0xf8] sm:$0xff] 0.0
    $region41: #{tpu_custom_call.1} parent=1 // pred_fallthru
      _
    %v113 = vld [vmem:[#allocation2] sm:$0xff]
    %v114 = vld [vmem:[#allocation2 + $0x8] sm:$0xff]
    %v115 = vld [vmem:[#allocation2 + $0x10] sm:$0xff]
    %v116 = vld [vmem:[#allocation2 + $0x18] sm:$0xff]
    %v117 = vld [vmem:[#allocation2 + $0x20] sm:$0xff]
    %v118 = vld [vmem:[#allocation2 + $0x28] sm:$0xff]
    %v119 = vld [vmem:[#allocation2 + $0x30] sm:$0xff]
    %v120 = vld [vmem:[#allocation2 + $0x38] sm:$0xff]
    %v121 = vld [vmem:[#allocation2 + $0x40] sm:$0xff]
    %v122 = vld [vmem:[#allocation2 + $0x48] sm:$0xff]
    %v123 = vld [vmem:[#allocation2 + $0x50] sm:$0xff]
    %v124 = vld [vmem:[#allocation2 + $0x58] sm:$0xff]
    %v125 = vld [vmem:[#allocation2 + $0x60] sm:$0xff]
    %v126 = vld [vmem:[#allocation2 + $0x68] sm:$0xff]
    %v127 = vld [vmem:[#allocation2 + $0x70] sm:$0xff]
    %v128 = vld [vmem:[#allocation2 + $0x78] sm:$0xff]
    %v129 = vld [vmem:[#allocation2 + $0x80] sm:$0xff]
    %v130 = vld [vmem:[#allocation2 + $0x88] sm:$0xff]
    %v131 = vld [vmem:[#allocation2 + $0x90] sm:$0xff]
    %v132 = vld [vmem:[#allocation2 + $0x98] sm:$0xff]
    %v133 = vld [vmem:[#allocation2 + $0xa0] sm:$0xff]
    %v134 = vld [vmem:[#allocation2 + $0xa8] sm:$0xff]
    %v135 = vld [vmem:[#allocation2 + $0xb0] sm:$0xff]
    %v136 = vld [vmem:[#allocation2 + $0xb8] sm:$0xff]
    %v137 = vld [vmem:[#allocation2 + $0xc0] sm:$0xff]
    %v138 = vld [vmem:[#allocation2 + $0xc8] sm:$0xff]
    %v139 = vld [vmem:[#allocation2 + $0xd0] sm:$0xff]
    %v140 = vld [vmem:[#allocation2 + $0xd8] sm:$0xff]
    %v141 = vld [vmem:[#allocation2 + $0xe0] sm:$0xff]
    %v142 = vld [vmem:[#allocation2 + $0xe8] sm:$0xff]
    %v143 = vld [vmem:[#allocation2 + $0xf0] sm:$0xff]
    %v144 = vld [vmem:[#allocation2 + $0xf8] sm:$0xff]
    %v145 = vld [vmem:[#allocation3] sm:$0xff]
    %v146 = vld [vmem:[#allocation3 + $0x8] sm:$0xff]
    %v147 = vld [vmem:[#allocation3 + $0x10] sm:$0xff]
    %v148 = vld [vmem:[#allocation3 + $0x18] sm:$0xff]
    %v149 = vld [vmem:[#allocation3 + $0x20] sm:$0xff]
    %v150 = vld [vmem:[#allocation3 + $0x28] sm:$0xff]
    %v151 = vld [vmem:[#allocation3 + $0x30] sm:$0xff]
    %v152 = vld [vmem:[#allocation3 + $0x38] sm:$0xff]
    %v153 = vld [vmem:[#allocation3 + $0x40] sm:$0xff]
    %v154 = vld [vmem:[#allocation3 + $0x48] sm:$0xff]
    %v155 = vld [vmem:[#allocation3 + $0x50] sm:$0xff]
    %v156 = vld [vmem:[#allocation3 + $0x58] sm:$0xff]
    %v157 = vld [vmem:[#allocation3 + $0x60] sm:$0xff]
    %v158 = vld [vmem:[#allocation3 + $0x68] sm:$0xff]
    %v159 = vld [vmem:[#allocation3 + $0x70] sm:$0xff]
    %v160 = vld [vmem:[#allocation3 + $0x78] sm:$0xff]
    %v161 = vld [vmem:[#allocation3 + $0x80] sm:$0xff]
    %v162 = vld [vmem:[#allocation3 + $0x88] sm:$0xff]
    %v163 = vld [vmem:[#allocation3 + $0x90] sm:$0xff]
    %v164 = vld [vmem:[#allocation3 + $0x98] sm:$0xff]
    %v165 = vld [vmem:[#allocation3 + $0xa0] sm:$0xff]
    %v166 = vld [vmem:[#allocation3 + $0xa8] sm:$0xff]
    %v167 = vld [vmem:[#allocation3 + $0xb0] sm:$0xff]
    %v168 = vld [vmem:[#allocation3 + $0xb8] sm:$0xff]
    %v169 = vld [vmem:[#allocation3 + $0xc0] sm:$0xff]
    %v170 = vld [vmem:[#allocation3 + $0xc8] sm:$0xff]
    %v171 = vld [vmem:[#allocation3 + $0xd0] sm:$0xff]
    %v172 = vld [vmem:[#allocation3 + $0xd8] sm:$0xff]
    %v173 = vld [vmem:[#allocation3 + $0xe0] sm:$0xff]
    %v174 = vld [vmem:[#allocation3 + $0xe8] sm:$0xff]
    %v175 = vld [vmem:[#allocation3 + $0xf0] sm:$0xff]
    %v176 = vld [vmem:[#allocation3 + $0xf8] sm:$0xff]
    %v177 = vld [vmem:[#allocation6] sm:$0xf]
    %v178 = vld [vmem:[#allocation6 + $0x4] sm:$0xf]
    %v179 = vld [vmem:[#allocation6 + $0x8] sm:$0xf]
    %v180 = vld [vmem:[#allocation6 + $0xc] sm:$0xf]
    %v181 = vld [vmem:[#allocation6 + $0x10] sm:$0xf]
    %v182 = vld [vmem:[#allocation6 + $0x14] sm:$0xf]
    %v183 = vld [vmem:[#allocation6 + $0x18] sm:$0xf]
    %v184 = vld [vmem:[#allocation6 + $0x1c] sm:$0xf]
    %v185 = vld [vmem:[#allocation6 + $0x20] sm:$0xf]
    %v186 = vld [vmem:[#allocation6 + $0x24] sm:$0xf]
    %v187 = vld [vmem:[#allocation6 + $0x28] sm:$0xf]
    %v188 = vld [vmem:[#allocation6 + $0x2c] sm:$0xf]
    %v189 = vld [vmem:[#allocation6 + $0x30] sm:$0xf]
    %v190 = vld [vmem:[#allocation6 + $0x34] sm:$0xf]
    %v191 = vld [vmem:[#allocation6 + $0x38] sm:$0xf]
    %v192 = vld [vmem:[#allocation6 + $0x3c] sm:$0xf]
    %v193 = vld [vmem:[#allocation6 + $0x40] sm:$0xf]
    %v194 = vld [vmem:[#allocation6 + $0x44] sm:$0xf]
    %v195 = vld [vmem:[#allocation6 + $0x48] sm:$0xf]
    %v196 = vld [vmem:[#allocation6 + $0x4c] sm:$0xf]
    %v197 = vld [vmem:[#allocation6 + $0x50] sm:$0xf]
    %v198 = vld [vmem:[#allocation6 + $0x54] sm:$0xf]
    %v199 = vld [vmem:[#allocation6 + $0x58] sm:$0xf]
    %v200 = vld [vmem:[#allocation6 + $0x5c] sm:$0xf]
    %v201 = vld [vmem:[#allocation6 + $0x60] sm:$0xf]
    %v202 = vld [vmem:[#allocation6 + $0x64] sm:$0xf]
    %v203 = vld [vmem:[#allocation6 + $0x68] sm:$0xf]
    %v204 = vld [vmem:[#allocation6 + $0x6c] sm:$0xf]
    %v205 = vld [vmem:[#allocation6 + $0x70] sm:$0xf]
    %v206 = vld [vmem:[#allocation6 + $0x74] sm:$0xf]
    %v207 = vld [vmem:[#allocation6 + $0x78] sm:$0xf]
    %v208 = vld [vmem:[#allocation6 + $0x7c] sm:$0xf]
    %v241 = vunpack.c.l.b16 %v145
    %v242 = vunpack.c.h.b16 %v145
    %v243 = vunpack.c.l.b16 %v146
    %v244 = vunpack.c.h.b16 %v146
    %v245 = vunpack.c.l.b16 %v147
    %v246 = vunpack.c.h.b16 %v147
    %v247 = vunpack.c.l.b16 %v148
    %v248 = vunpack.c.h.b16 %v148
    %v249 = vunpack.c.l.b16 %v149
    %v250 = vunpack.c.h.b16 %v149
    %v251 = vunpack.c.l.b16 %v150
    %v252 = vunpack.c.h.b16 %v150
    %v253 = vunpack.c.l.b16 %v151
    %v254 = vunpack.c.h.b16 %v151
    %v255 = vunpack.c.l.b16 %v152
    %v256 = vunpack.c.h.b16 %v152
    %v257 = vunpack.c.l.b16 %v153
    %v258 = vunpack.c.h.b16 %v153
    %v259 = vunpack.c.l.b16 %v154
    %v260 = vunpack.c.h.b16 %v154
    %v261 = vunpack.c.l.b16 %v155
    %v262 = vunpack.c.h.b16 %v155
    %v263 = vunpack.c.l.b16 %v156
    %v264 = vunpack.c.h.b16 %v156
    %v265 = vunpack.c.l.b16 %v157
    %v266 = vunpack.c.h.b16 %v157
    %v267 = vunpack.c.l.b16 %v158
    %v268 = vunpack.c.h.b16 %v158
    %v269 = vunpack.c.l.b16 %v159
    %v270 = vunpack.c.h.b16 %v159
    %v271 = vunpack.c.l.b16 %v160
    %v272 = vunpack.c.h.b16 %v160
    %v273 = vunpack.c.l.b16 %v161
    %v274 = vunpack.c.h.b16 %v161
    %v275 = vunpack.c.l.b16 %v162
    %v276 = vunpack.c.h.b16 %v162
    %v277 = vunpack.c.l.b16 %v163
    %v278 = vunpack.c.h.b16 %v163
    %v279 = vunpack.c.l.b16 %v164
    %v280 = vunpack.c.h.b16 %v164
    %v281 = vunpack.c.l.b16 %v165
    %v282 = vunpack.c.h.b16 %v165
    %v283 = vunpack.c.l.b16 %v166
    %v284 = vunpack.c.h.b16 %v166
    %v285 = vunpack.c.l.b16 %v167
    %v286 = vunpack.c.h.b16 %v167
    %v287 = vunpack.c.l.b16 %v168
    %v288 = vunpack.c.h.b16 %v168
    %v289 = vunpack.c.l.b16 %v169
    %v290 = vunpack.c.h.b16 %v169
    %v291 = vunpack.c.l.b16 %v170
    %v292 = vunpack.c.h.b16 %v170
    %v293 = vunpack.c.l.b16 %v171
    %v294 = vunpack.c.h.b16 %v171
    %v295 = vunpack.c.l.b16 %v172
    %v296 = vunpack.c.h.b16 %v172
    %v297 = vunpack.c.l.b16 %v173
    %v298 = vunpack.c.h.b16 %v173
    %v299 = vunpack.c.l.b16 %v174
    %v300 = vunpack.c.h.b16 %v174
    %v301 = vunpack.c.l.b16 %v175
    %v302 = vunpack.c.h.b16 %v175
    %v303 = vunpack.c.l.b16 %v176
    %v304 = vunpack.c.h.b16 %v176
    %v305 = vpack.c.b16 %v243, %v241
    %v306 = vpack.c.b16 %v244, %v242
    %v307 = vpack.c.b16 %v247, %v245
    %v308 = vpack.c.b16 %v248, %v246
    %v309 = vpack.c.b16 %v251, %v249
    %v310 = vpack.c.b16 %v252, %v250
    %v311 = vpack.c.b16 %v255, %v253
    %v312 = vpack.c.b16 %v256, %v254
    %v313 = vpack.c.b16 %v259, %v257
    %v314 = vpack.c.b16 %v260, %v258
    %v315 = vpack.c.b16 %v263, %v261
    %v316 = vpack.c.b16 %v264, %v262
    %v317 = vpack.c.b16 %v267, %v265
    %v318 = vpack.c.b16 %v268, %v266
    %v319 = vpack.c.b16 %v271, %v269
    %v320 = vpack.c.b16 %v272, %v270
    %v321 = vpack.c.b16 %v275, %v273
    %v322 = vpack.c.b16 %v276, %v274
    %v323 = vpack.c.b16 %v279, %v277
    %v324 = vpack.c.b16 %v280, %v278
    %v325 = vpack.c.b16 %v283, %v281
    %v326 = vpack.c.b16 %v284, %v282
    %v327 = vpack.c.b16 %v287, %v285
    %v328 = vpack.c.b16 %v288, %v286
    %v329 = vpack.c.b16 %v291, %v289
    %v330 = vpack.c.b16 %v292, %v290
    %v331 = vpack.c.b16 %v295, %v293
    %v332 = vpack.c.b16 %v296, %v294
    %v333 = vpack.c.b16 %v299, %v297
    %v334 = vpack.c.b16 %v300, %v298
    %v335 = vpack.c.b16 %v303, %v301
    %v336 = vpack.c.b16 %v304, %v302
    %v401 = vunpack.c.l.b16 %v177
    %v402 = vunpack.c.l.b16 %v178
    %v403 = vunpack.c.l.b16 %v179
    %v404 = vunpack.c.l.b16 %v180
    %v405 = vunpack.c.l.b16 %v181
    %v406 = vunpack.c.l.b16 %v182
    %v407 = vunpack.c.l.b16 %v183
    %v408 = vunpack.c.l.b16 %v184
    %v409 = vunpack.c.l.b16 %v185
    %v410 = vunpack.c.l.b16 %v186
    %v411 = vunpack.c.l.b16 %v187
    %v412 = vunpack.c.l.b16 %v188
    %v413 = vunpack.c.l.b16 %v189
    %v414 = vunpack.c.l.b16 %v190
    %v415 = vunpack.c.l.b16 %v191
    %v416 = vunpack.c.l.b16 %v192
    %v417 = vunpack.c.l.b16 %v193
    %v418 = vunpack.c.l.b16 %v194
    %v419 = vunpack.c.l.b16 %v195
    %v420 = vunpack.c.l.b16 %v196
    %v421 = vunpack.c.l.b16 %v197
    %v422 = vunpack.c.l.b16 %v198
    %v423 = vunpack.c.l.b16 %v199
    %v424 = vunpack.c.l.b16 %v200
    %v425 = vunpack.c.l.b16 %v201
    %v426 = vunpack.c.l.b16 %v202
    %v427 = vunpack.c.l.b16 %v203
    %v428 = vunpack.c.l.b16 %v204
    %v429 = vunpack.c.l.b16 %v205
    %v430 = vunpack.c.l.b16 %v206
    %v431 = vunpack.c.l.b16 %v207
    %v432 = vunpack.c.l.b16 %v208
    %v433 = vpack.c.b16 %v402, %v401
    %v434 = vpack.c.b16 %v404, %v403
    %v435 = vpack.c.b16 %v406, %v405
    %v436 = vpack.c.b16 %v408, %v407
    %v437 = vpack.c.b16 %v410, %v409
    %v438 = vpack.c.b16 %v412, %v411
    %v439 = vpack.c.b16 %v414, %v413
    %v440 = vpack.c.b16 %v416, %v415
    %v441 = vpack.c.b16 %v418, %v417
    %v442 = vpack.c.b16 %v420, %v419
    %v443 = vpack.c.b16 %v422, %v421
    %v444 = vpack.c.b16 %v424, %v423
    %v445 = vpack.c.b16 %v426, %v425
    %v446 = vpack.c.b16 %v428, %v427
    %v447 = vpack.c.b16 %v430, %v429
    %v448 = vpack.c.b16 %v432, %v431
    %465 = vmatprep.subr.bf16.mxu0 0
    %466 = vmatpush1.bf16.msra.mxu0 %v440
    %467 = vmatprep.subr.bf16.mxu0 0
    %468 = vmatpush1.bf16.msra.mxu0 %v439
    %469 = vmatprep.subr.bf16.mxu0 0
    %470 = vmatpush1.bf16.msra.mxu0 %v438
    %471 = vmatprep.subr.bf16.mxu0 0
    %472 = vmatpush1.bf16.msra.mxu0 %v437
    %473 = vmatprep.subr.bf16.mxu0 0
    %474 = vmatpush1.bf16.msra.mxu0 %v436
    %475 = vmatprep.subr.bf16.mxu0 0
    %476 = vmatpush1.bf16.msra.mxu0 %v435
    %477 = vmatprep.subr.bf16.mxu0 0
    %478 = vmatpush1.bf16.msra.mxu0 %v434
    %479 = vmatprep.subr.bf16.mxu0 0
    %480 = vmatpush1.bf16.msra.mxu0 %v433
    %481 = vmatprep.subr.bf16.mxu0 0
    %482 = vmatpush2.bf16.msra.mxu0 %v448
    %483 = vmatprep.subr.bf16.mxu0 0
    %484 = vmatpush2.bf16.msra.mxu0 %v447
    %485 = vmatprep.subr.bf16.mxu0 0
    %486 = vmatpush2.bf16.msra.mxu0 %v446
    %487 = vmatprep.subr.bf16.mxu0 0
    %488 = vmatpush2.bf16.msra.mxu0 %v445
    %489 = vmatprep.subr.bf16.mxu0 0
    %490 = vmatpush2.bf16.msra.mxu0 %v444
    %491 = vmatprep.subr.bf16.mxu0 0
    %492 = vmatpush2.bf16.msra.mxu0 %v443
    %493 = vmatprep.subr.bf16.mxu0 0
    %494 = vmatpush2.bf16.msra.mxu0 %v442
    %495 = vmatprep.subr.bf16.mxu0 0
    %496 = vmatpush2.bf16.msra.mxu0 %v441
    %497 = vmatprep.mubr.bf16.mxu0 %v306
    %498 = vmatmul.mubr.bf16.gmra.mxu0 %v305
    %v499 = vpop.f32.mrf.mxu0
    %v500 = vadd.f32 0.0, %v499
    %v501 = vpop.f32.mrf.mxu0
    %v502 = vpop.f32.mrf.mxu0
    %v503 = vadd.f32 0.0, %v502
    %v504 = vpop.f32.mrf.mxu0
    %505 = vmatprep.mubr.bf16.mxu0 %v308
    %506 = vmatmul.mubr.bf16.gmra.mxu0 %v307
    %v507 = vpop.f32.mrf.mxu0
    %v508 = vadd.f32 0.0, %v507
    %v509 = vpop.f32.mrf.mxu0
    %v510 = vpop.f32.mrf.mxu0
    %v511 = vadd.f32 0.0, %v510
    %v512 = vpop.f32.mrf.mxu0
    %513 = vmatprep.mubr.bf16.mxu0 %v310
    %514 = vmatmul.mubr.bf16.gmra.mxu0 %v309
    %v515 = vpop.f32.mrf.mxu0
    %v516 = vadd.f32 0.0, %v515
    %v517 = vpop.f32.mrf.mxu0
    %v518 = vpop.f32.mrf.mxu0
    %v519 = vadd.f32 0.0, %v518
    %v520 = vpop.f32.mrf.mxu0
    %521 = vmatprep.mubr.bf16.mxu0 %v312
    %522 = vmatmul.mubr.bf16.gmra.mxu0 %v311
    %v523 = vpop.f32.mrf.mxu0
    %v524 = vadd.f32 0.0, %v523
    %v525 = vpop.f32.mrf.mxu0
    %v526 = vpop.f32.mrf.mxu0
    %v527 = vadd.f32 0.0, %v526
    %v528 = vpop.f32.mrf.mxu0
    %529 = vmatprep.mubr.bf16.mxu0 %v314
    %530 = vmatmul.mubr.bf16.gmra.mxu0 %v313
    %v531 = vpop.f32.mrf.mxu0
    %v532 = vadd.f32 0.0, %v531
    %v533 = vpop.f32.mrf.mxu0
    %v534 = vpop.f32.mrf.mxu0
    %v535 = vadd.f32 0.0, %v534
    %v536 = vpop.f32.mrf.mxu0
    %537 = vmatprep.mubr.bf16.mxu0 %v316
    %538 = vmatmul.mubr.bf16.gmra.mxu0 %v315
    %v539 = vpop.f32.mrf.mxu0
    %v540 = vadd.f32 0.0, %v539
    %v541 = vpop.f32.mrf.mxu0
    %v542 = vpop.f32.mrf.mxu0
    %v543 = vadd.f32 0.0, %v542
    %v544 = vpop.f32.mrf.mxu0
    %545 = vmatprep.mubr.bf16.mxu0 %v318
    %546 = vmatmul.mubr.bf16.gmra.mxu0 %v317
    %v547 = vpop.f32.mrf.mxu0
    %v548 = vadd.f32 0.0, %v547
    %v549 = vpop.f32.mrf.mxu0
    %v550 = vpop.f32.mrf.mxu0
    %v551 = vadd.f32 0.0, %v550
    %v552 = vpop.f32.mrf.mxu0
    %553 = vmatprep.mubr.bf16.mxu0 %v320
    %554 = vmatmul.mubr.bf16.gmra.mxu0 %v319
    %v555 = vpop.f32.mrf.mxu0
    %v556 = vadd.f32 0.0, %v555
    %v557 = vpop.f32.mrf.mxu0
    %v558 = vpop.f32.mrf.mxu0
    %v559 = vadd.f32 0.0, %v558
    %v560 = vpop.f32.mrf.mxu0
    %561 = vmatprep.mubr.bf16.mxu0 %v322
    %562 = vmatmul.mubr.bf16.gmra.mxu0 %v321
    %v563 = vpop.f32.mrf.mxu0
    %v564 = vadd.f32 0.0, %v563
    %v565 = vpop.f32.mrf.mxu0
    %v566 = vpop.f32.mrf.mxu0
    %v567 = vadd.f32 0.0, %v566
    %v568 = vpop.f32.mrf.mxu0
    %569 = vmatprep.mubr.bf16.mxu0 %v324
    %570 = vmatmul.mubr.bf16.gmra.mxu0 %v323
    %v571 = vpop.f32.mrf.mxu0
    %v572 = vadd.f32 0.0, %v571
    %v573 = vpop.f32.mrf.mxu0
    %v574 = vpop.f32.mrf.mxu0
    %v575 = vadd.f32 0.0, %v574
    %v576 = vpop.f32.mrf.mxu0
    %577 = vmatprep.mubr.bf16.mxu0 %v326
    %578 = vmatmul.mubr.bf16.gmra.mxu0 %v325
    %v579 = vpop.f32.mrf.mxu0
    %v580 = vadd.f32 0.0, %v579
    %v581 = vpop.f32.mrf.mxu0
    %v582 = vpop.f32.mrf.mxu0
    %v583 = vadd.f32 0.0, %v582
    %v584 = vpop.f32.mrf.mxu0
    %585 = vmatprep.mubr.bf16.mxu0 %v328
    %586 = vmatmul.mubr.bf16.gmra.mxu0 %v327
    %v587 = vpop.f32.mrf.mxu0
    %v588 = vadd.f32 0.0, %v587
    %v589 = vpop.f32.mrf.mxu0
    %v590 = vpop.f32.mrf.mxu0
    %v591 = vadd.f32 0.0, %v590
    %v592 = vpop.f32.mrf.mxu0
    %593 = vmatprep.mubr.bf16.mxu0 %v330
    %594 = vmatmul.mubr.bf16.gmra.mxu0 %v329
    %v595 = vpop.f32.mrf.mxu0
    %v596 = vadd.f32 0.0, %v595
    %v597 = vpop.f32.mrf.mxu0
    %v598 = vpop.f32.mrf.mxu0
    %v599 = vadd.f32 0.0, %v598
    %v600 = vpop.f32.mrf.mxu0
    %601 = vmatprep.mubr.bf16.mxu0 %v332
    %602 = vmatmul.mubr.bf16.gmra.mxu0 %v331
    %v603 = vpop.f32.mrf.mxu0
    %v604 = vadd.f32 0.0, %v603
    %v605 = vpop.f32.mrf.mxu0
    %v606 = vpop.f32.mrf.mxu0
    %v607 = vadd.f32 0.0, %v606
    %v608 = vpop.f32.mrf.mxu0
    %609 = vmatprep.mubr.bf16.mxu0 %v334
    %610 = vmatmul.mubr.bf16.gmra.mxu0 %v333
    %v611 = vpop.f32.mrf.mxu0
    %v612 = vadd.f32 0.0, %v611
    %v613 = vpop.f32.mrf.mxu0
    %v614 = vpop.f32.mrf.mxu0
    %v615 = vadd.f32 0.0, %v614
    %v616 = vpop.f32.mrf.mxu0
    %617 = vmatprep.mubr.bf16.mxu0 %v336
    %618 = vmatmul.mubr.bf16.gmra.mxu0 %v335
    %v619 = vpop.f32.mrf.mxu0
    %v620 = vadd.f32 0.0, %v619
    %v621 = vpop.f32.mrf.mxu0
    %v622 = vpop.f32.mrf.mxu0
    %v623 = vadd.f32 0.0, %v622
    %v624 = vpop.f32.mrf.mxu0
    %625 = vdwg.mxu0
    %v626 = vadd.f32 %v113, %v500
    %v627 = vadd.f32 %v114, %v503
    %v628 = vadd.f32 %v115, %v508
    %v629 = vadd.f32 %v116, %v511
    %v630 = vadd.f32 %v117, %v516
    %v631 = vadd.f32 %v118, %v519
    %v632 = vadd.f32 %v119, %v524
    %v633 = vadd.f32 %v120, %v527
    %v634 = vadd.f32 %v121, %v532
    %v635 = vadd.f32 %v122, %v535
    %v636 = vadd.f32 %v123, %v540
    %v637 = vadd.f32 %v124, %v543
    %v638 = vadd.f32 %v125, %v548
    %v639 = vadd.f32 %v126, %v551
    %v640 = vadd.f32 %v127, %v556
    %v641 = vadd.f32 %v128, %v559
    %v642 = vadd.f32 %v129, %v564
    %v643 = vadd.f32 %v130, %v567
    %v644 = vadd.f32 %v131, %v572
    %v645 = vadd.f32 %v132, %v575
    %v646 = vadd.f32 %v133, %v580
    %v647 = vadd.f32 %v134, %v583
    %v648 = vadd.f32 %v135, %v588
    %v649 = vadd.f32 %v136, %v591
    %v650 = vadd.f32 %v137, %v596
    %v651 = vadd.f32 %v138, %v599
    %v652 = vadd.f32 %v139, %v604
    %v653 = vadd.f32 %v140, %v607
    %v654 = vadd.f32 %v141, %v612
    %v655 = vadd.f32 %v142, %v615
    %v656 = vadd.f32 %v143, %v620
    %v657 = vadd.f32 %v144, %v623
    %658 = vst [vmem:[#allocation2] sm:$0xff] %v626
    %659 = vst [vmem:[#allocation2 + $0x8] sm:$0xff] %v627
    %660 = vst [vmem:[#allocation2 + $0x10] sm:$0xff] %v628
    %661 = vst [vmem:[#allocation2 + $0x18] sm:$0xff] %v629
    %662 = vst [vmem:[#allocation2 + $0x20] sm:$0xff] %v630
    %663 = vst [vmem:[#allocation2 + $0x28] sm:$0xff] %v631
    %664 = vst [vmem:[#allocation2 + $0x30] sm:$0xff] %v632
    %665 = vst [vmem:[#allocation2 + $0x38] sm:$0xff] %v633
    %666 = vst [vmem:[#allocation2 + $0x40] sm:$0xff] %v634
    %667 = vst [vmem:[#allocation2 + $0x48] sm:$0xff] %v635
    %668 = vst [vmem:[#allocation2 + $0x50] sm:$0xff] %v636
    %669 = vst [vmem:[#allocation2 + $0x58] sm:$0xff] %v637
    %670 = vst [vmem:[#allocation2 + $0x60] sm:$0xff] %v638
    %671 = vst [vmem:[#allocation2 + $0x68] sm:$0xff] %v639
    %672 = vst [vmem:[#allocation2 + $0x70] sm:$0xff] %v640
    %673 = vst [vmem:[#allocation2 + $0x78] sm:$0xff] %v641
    %674 = vst [vmem:[#allocation2 + $0x80] sm:$0xff] %v642
    %675 = vst [vmem:[#allocation2 + $0x88] sm:$0xff] %v643
    %676 = vst [vmem:[#allocation2 + $0x90] sm:$0xff] %v644
    %677 = vst [vmem:[#allocation2 + $0x98] sm:$0xff] %v645
    %678 = vst [vmem:[#allocation2 + $0xa0] sm:$0xff] %v646
    %679 = vst [vmem:[#allocation2 + $0xa8] sm:$0xff] %v647
    %680 = vst [vmem:[#allocation2 + $0xb0] sm:$0xff] %v648
    %681 = vst [vmem:[#allocation2 + $0xb8] sm:$0xff] %v649
    %682 = vst [vmem:[#allocation2 + $0xc0] sm:$0xff] %v650
    %683 = vst [vmem:[#allocation2 + $0xc8] sm:$0xff] %v651
    %684 = vst [vmem:[#allocation2 + $0xd0] sm:$0xff] %v652
    %685 = vst [vmem:[#allocation2 + $0xd8] sm:$0xff] %v653
    %686 = vst [vmem:[#allocation2 + $0xe0] sm:$0xff] %v654
    %687 = vst [vmem:[#allocation2 + $0xe8] sm:$0xff] %v655
    %688 = vst [vmem:[#allocation2 + $0xf0] sm:$0xff] %v656
    %689 = vst [vmem:[#allocation2 + $0xf8] sm:$0xff] %v657
    // Predicated region
    $region42: #{tpu_custom_call.1} parent=1 // pred_check
      %p690 = pneg %p77
    $region43: #{tpu_custom_call.1} parent=1 // pred_check_branch
      %692 = sbr.rel (%p690) target = $region45
    $region44: #{tpu_custom_call.1} parent=1 // pred_region
      %v693 = vld [vmem:[#allocation2] sm:$0xff]
      %v694 = vld [vmem:[#allocation2 + $0x8] sm:$0xff]
      %v695 = vld [vmem:[#allocation2 + $0x10] sm:$0xff]
      %v696 = vld [vmem:[#allocation2 + $0x18] sm:$0xff]
      %v697 = vld [vmem:[#allocation2 + $0x20] sm:$0xff]
      %v698 = vld [vmem:[#allocation2 + $0x28] sm:$0xff]
      %v699 = vld [vmem:[#allocation2 + $0x30] sm:$0xff]
      %v700 = vld [vmem:[#allocation2 + $0x38] sm:$0xff]
      %v701 = vld [vmem:[#allocation2 + $0x40] sm:$0xff]
      %v702 = vld [vmem:[#allocation2 + $0x48] sm:$0xff]
      %v703 = vld [vmem:[#allocation2 + $0x50] sm:$0xff]
      %v704 = vld [vmem:[#allocation2 + $0x58] sm:$0xff]
      %v705 = vld [vmem:[#allocation2 + $0x60] sm:$0xff]
      %v706 = vld [vmem:[#allocation2 + $0x68] sm:$0xff]
      %v707 = vld [vmem:[#allocation2 + $0x70] sm:$0xff]
      %v708 = vld [vmem:[#allocation2 + $0x78] sm:$0xff]
      %v709 = vld [vmem:[#allocation2 + $0x80] sm:$0xff]
      %v710 = vld [vmem:[#allocation2 + $0x88] sm:$0xff]
      %v711 = vld [vmem:[#allocation2 + $0x90] sm:$0xff]
      %v712 = vld [vmem:[#allocation2 + $0x98] sm:$0xff]
      %v713 = vld [vmem:[#allocation2 + $0xa0] sm:$0xff]
      %v714 = vld [vmem:[#allocation2 + $0xa8] sm:$0xff]
      %v715 = vld [vmem:[#allocation2 + $0xb0] sm:$0xff]
      %v716 = vld [vmem:[#allocation2 + $0xb8] sm:$0xff]
      %v717 = vld [vmem:[#allocation2 + $0xc0] sm:$0xff]
      %v718 = vld [vmem:[#allocation2 + $0xc8] sm:$0xff]
      %v719 = vld [vmem:[#allocation2 + $0xd0] sm:$0xff]
      %v720 = vld [vmem:[#allocation2 + $0xd8] sm:$0xff]
      %v721 = vld [vmem:[#allocation2 + $0xe0] sm:$0xff]
      %v722 = vld [vmem:[#allocation2 + $0xe8] sm:$0xff]
      %v723 = vld [vmem:[#allocation2 + $0xf0] sm:$0xff]
      %v724 = vld [vmem:[#allocation2 + $0xf8] sm:$0xff]
      %v725 = vpack.c.bf16 %v694, %v693
      %v726 = vpack.c.bf16 %v696, %v695
      %v727 = vpack.c.bf16 %v698, %v697
      %v728 = vpack.c.bf16 %v700, %v699
      %v729 = vpack.c.bf16 %v702, %v701
      %v730 = vpack.c.bf16 %v704, %v703
      %v731 = vpack.c.bf16 %v706, %v705
      %v732 = vpack.c.bf16 %v708, %v707
      %v733 = vpack.c.bf16 %v710, %v709
      %v734 = vpack.c.bf16 %v712, %v711
      %v735 = vpack.c.bf16 %v714, %v713
      %v736 = vpack.c.bf16 %v716, %v715
      %v737 = vpack.c.bf16 %v718, %v717
      %v738 = vpack.c.bf16 %v720, %v719
      %v739 = vpack.c.bf16 %v722, %v721
      %v740 = vpack.c.bf16 %v724, %v723
      %v741 = vld [vmem:[#allocation8] sm:$0xf]
      %v742 = vld [vmem:[#allocation8 + $0x4] sm:$0xf]
      %v743 = vld [vmem:[#allocation8 + $0x8] sm:$0xf]
      %v744 = vld [vmem:[#allocation8 + $0xc] sm:$0xf]
      %v745 = vld [vmem:[#allocation8 + $0x10] sm:$0xf]
      %v746 = vld [vmem:[#allocation8 + $0x14] sm:$0xf]
      %v747 = vld [vmem:[#allocation8 + $0x18] sm:$0xf]
      %v748 = vld [vmem:[#allocation8 + $0x1c] sm:$0xf]
      %v749 = vld [vmem:[#allocation8 + $0x20] sm:$0xf]
      %v750 = vld [vmem:[#allocation8 + $0x24] sm:$0xf]
      %v751 = vld [vmem:[#allocation8 + $0x28] sm:$0xf]
      %v752 = vld [vmem:[#allocation8 + $0x2c] sm:$0xf]
      %v753 = vld [vmem:[#allocation8 + $0x30] sm:$0xf]
      %v754 = vld [vmem:[#allocation8 + $0x34] sm:$0xf]
      %v755 = vld [vmem:[#allocation8 + $0x38] sm:$0xf]
      %v756 = vld [vmem:[#allocation8 + $0x3c] sm:$0xf]
      %v757 = vld [vmem:[%s3] sm:$0x1]
      %v759 = vlaneseq
      %v760 = vshrl.u32 %v759, 7
      %v761 = vsub.s32 0, %v760
      %v762 = vrot.slane %v757, %v761
      %v780 = vunpack.c.l.b16 %v741
      %v781 = vunpack.c.l.b16 %v742
      %v782 = vunpack.c.l.b16 %v743
      %v783 = vunpack.c.l.b16 %v744
      %v784 = vunpack.c.l.b16 %v745
      %v785 = vunpack.c.l.b16 %v746
      %v786 = vunpack.c.l.b16 %v747
      %v787 = vunpack.c.l.b16 %v748
      %v788 = vunpack.c.l.b16 %v749
      %v789 = vunpack.c.l.b16 %v750
      %v790 = vunpack.c.l.b16 %v751
      %v791 = vunpack.c.l.b16 %v752
      %v792 = vunpack.c.l.b16 %v753
      %v793 = vunpack.c.l.b16 %v754
      %v794 = vunpack.c.l.b16 %v755
      %v795 = vunpack.c.l.b16 %v756
      %v796 = vpack.c.b16 %v781, %v780
      %v797 = vpack.c.b16 %v783, %v782
      %v798 = vpack.c.b16 %v785, %v784
      %v799 = vpack.c.b16 %v787, %v786
      %v800 = vpack.c.b16 %v789, %v788
      %v801 = vpack.c.b16 %v791, %v790
      %v802 = vpack.c.b16 %v793, %v792
      %v803 = vpack.c.b16 %v795, %v794
      %812 = vmatprep.subr.bf16.mxu0 0
      %813 = vmatpush1.bf16.msra.mxu0 %v803
      %814 = vmatprep.subr.bf16.mxu0 0
      %815 = vmatpush1.bf16.msra.mxu0 %v802
      %816 = vmatprep.subr.bf16.mxu0 0
      %817 = vmatpush1.bf16.msra.mxu0 %v801
      %818 = vmatprep.subr.bf16.mxu0 0
      %819 = vmatpush1.bf16.msra.mxu0 %v800
      %820 = vmatprep.subr.bf16.mxu0 0
      %821 = vmatpush1.bf16.msra.mxu0 %v799
      %822 = vmatprep.subr.bf16.mxu0 0
      %823 = vmatpush1.bf16.msra.mxu0 %v798
      %824 = vmatprep.subr.bf16.mxu0 0
      %825 = vmatpush1.bf16.msra.mxu0 %v797
      %826 = vmatprep.subr.bf16.mxu0 0
      %827 = vmatpush1.bf16.msra.mxu0 %v796
      %828 = vmatprep.subr.bf16.mxu0 0
      %829 = vmatpush2.bf16.msra.mxu0 0
      %830 = vmatprep.subr.bf16.mxu0 0
      %831 = vmatpush2.bf16.msra.mxu0 0
      %832 = vmatprep.subr.bf16.mxu0 0
      %833 = vmatpush2.bf16.msra.mxu0 0
      %834 = vmatprep.subr.bf16.mxu0 0
      %835 = vmatpush2.bf16.msra.mxu0 0
      %836 = vmatprep.subr.bf16.mxu0 0
      %837 = vmatpush2.bf16.msra.mxu0 0
      %838 = vmatprep.subr.bf16.mxu0 0
      %839 = vmatpush2.bf16.msra.mxu0 0
      %840 = vmatprep.subr.bf16.mxu0 0
      %841 = vmatpush2.bf16.msra.mxu0 0
      %842 = vmatprep.subr.bf16.mxu0 0
      %843 = vmatpush2.bf16.msra.mxu0 0
      %844 = vmatprep.mubr.bf16.mxu0 0
      %845 = vmatmul.mubr.bf16.gmra.mxu0 %v725
      %v846 = vpop.f32.mrf.mxu0
      %v847 = vadd.f32 %v762, %v846
      %v848 = vpop.f32.mrf.mxu0
      %v849 = vpop.f32.mrf.mxu0
      %v850 = vadd.f32 %v762, %v849
      %v851 = vpop.f32.mrf.mxu0
      %852 = vmatprep.mubr.bf16.mxu0 0
      %853 = vmatmul.mubr.bf16.gmra.mxu0 %v726
      %v854 = vpop.f32.mrf.mxu0
      %v855 = vadd.f32 %v762, %v854
      %v856 = vpop.f32.mrf.mxu0
      %v857 = vpop.f32.mrf.mxu0
      %v858 = vadd.f32 %v762, %v857
      %v859 = vpop.f32.mrf.mxu0
      %860 = vmatprep.mubr.bf16.mxu0 0
      %861 = vmatmul.mubr.bf16.gmra.mxu0 %v727
      %v862 = vpop.f32.mrf.mxu0
      %v863 = vadd.f32 %v762, %v862
      %v864 = vpop.f32.mrf.mxu0
      %v865 = vpop.f32.mrf.mxu0
      %v866 = vadd.f32 %v762, %v865
      %v867 = vpop.f32.mrf.mxu0
      %868 = vmatprep.mubr.bf16.mxu0 0
      %869 = vmatmul.mubr.bf16.gmra.mxu0 %v728
      %v870 = vpop.f32.mrf.mxu0
      %v871 = vadd.f32 %v762, %v870
      %v872 = vpop.f32.mrf.mxu0
      %v873 = vpop.f32.mrf.mxu0
      %v874 = vadd.f32 %v762, %v873
      %v875 = vpop.f32.mrf.mxu0
      %876 = vmatprep.mubr.bf16.mxu0 0
      %877 = vmatmul.mubr.bf16.gmra.mxu0 %v729
      %v878 = vpop.f32.mrf.mxu0
      %v879 = vadd.f32 %v762, %v878
      %v880 = vpop.f32.mrf.mxu0
      %v881 = vpop.f32.mrf.mxu0
      %v882 = vadd.f32 %v762, %v881
      %v883 = vpop.f32.mrf.mxu0
      %884 = vmatprep.mubr.bf16.mxu0 0
      %885 = vmatmul.mubr.bf16.gmra.mxu0 %v730
      %v886 = vpop.f32.mrf.mxu0
      %v887 = vadd.f32 %v762, %v886
      %v888 = vpop.f32.mrf.mxu0
      %v889 = vpop.f32.mrf.mxu0
      %v890 = vadd.f32 %v762, %v889
      %v891 = vpop.f32.mrf.mxu0
      %892 = vmatprep.mubr.bf16.mxu0 0
      %893 = vmatmul.mubr.bf16.gmra.mxu0 %v731
      %v894 = vpop.f32.mrf.mxu0
      %v895 = vadd.f32 %v762, %v894
      %v896 = vpop.f32.mrf.mxu0
      %v897 = vpop.f32.mrf.mxu0
      %v898 = vadd.f32 %v762, %v897
      %v899 = vpop.f32.mrf.mxu0
      %900 = vmatprep.mubr.bf16.mxu0 0
      %901 = vmatmul.mubr.bf16.gmra.mxu0 %v732
      %v902 = vpop.f32.mrf.mxu0
      %v903 = vadd.f32 %v762, %v902
      %v904 = vpop.f32.mrf.mxu0
      %v905 = vpop.f32.mrf.mxu0
      %v906 = vadd.f32 %v762, %v905
      %v907 = vpop.f32.mrf.mxu0
      %908 = vmatprep.mubr.bf16.mxu0 0
      %909 = vmatmul.mubr.bf16.gmra.mxu0 %v733
      %v910 = vpop.f32.mrf.mxu0
      %v911 = vadd.f32 %v762, %v910
      %v912 = vpop.f32.mrf.mxu0
      %v913 = vpop.f32.mrf.mxu0
      %v914 = vadd.f32 %v762, %v913
      %v915 = vpop.f32.mrf.mxu0
      %916 = vmatprep.mubr.bf16.mxu0 0
      %917 = vmatmul.mubr.bf16.gmra.mxu0 %v734
      %v918 = vpop.f32.mrf.mxu0
      %v919 = vadd.f32 %v762, %v918
      %v920 = vpop.f32.mrf.mxu0
      %v921 = vpop.f32.mrf.mxu0
      %v922 = vadd.f32 %v762, %v921
      %v923 = vpop.f32.mrf.mxu0
      %924 = vmatprep.mubr.bf16.mxu0 0
      %925 = vmatmul.mubr.bf16.gmra.mxu0 %v735
      %v926 = vpop.f32.mrf.mxu0
      %v927 = vadd.f32 %v762, %v926
      %v928 = vpop.f32.mrf.mxu0
      %v929 = vpop.f32.mrf.mxu0
      %v930 = vadd.f32 %v762, %v929
      %v931 = vpop.f32.mrf.mxu0
      %932 = vmatprep.mubr.bf16.mxu0 0
      %933 = vmatmul.mubr.bf16.gmra.mxu0 %v736
      %v934 = vpop.f32.mrf.mxu0
      %v935 = vadd.f32 %v762, %v934
      %v936 = vpop.f32.mrf.mxu0
      %v937 = vpop.f32.mrf.mxu0
      %v938 = vadd.f32 %v762, %v937
      %v939 = vpop.f32.mrf.mxu0
      %940 = vmatprep.mubr.bf16.mxu0 0
      %941 = vmatmul.mubr.bf16.gmra.mxu0 %v737
      %v942 = vpop.f32.mrf.mxu0
      %v943 = vadd.f32 %v762, %v942
      %v944 = vpop.f32.mrf.mxu0
      %v945 = vpop.f32.mrf.mxu0
      %v946 = vadd.f32 %v762, %v945
      %v947 = vpop.f32.mrf.mxu0
      %948 = vmatprep.mubr.bf16.mxu0 0
      %949 = vmatmul.mubr.bf16.gmra.mxu0 %v738
      %v950 = vpop.f32.mrf.mxu0
      %v951 = vadd.f32 %v762, %v950
      %v952 = vpop.f32.mrf.mxu0
      %v953 = vpop.f32.mrf.mxu0
      %v954 = vadd.f32 %v762, %v953
      %v955 = vpop.f32.mrf.mxu0
      %956 = vmatprep.mubr.bf16.mxu0 0
      %957 = vmatmul.mubr.bf16.gmra.mxu0 %v739
      %v958 = vpop.f32.mrf.mxu0
      %v959 = vadd.f32 %v762, %v958
      %v960 = vpop.f32.mrf.mxu0
      %v961 = vpop.f32.mrf.mxu0
      %v962 = vadd.f32 %v762, %v961
      %v963 = vpop.f32.mrf.mxu0
      %964 = vmatprep.mubr.bf16.mxu0 0
      %965 = vmatmul.mubr.bf16.gmra.mxu0 %v740
      %v966 = vpop.f32.mrf.mxu0
      %v967 = vadd.f32 %v762, %v966
      %v968 = vpop.f32.mrf.mxu0
      %v969 = vpop.f32.mrf.mxu0
      %v970 = vadd.f32 %v762, %v969
      %v971 = vpop.f32.mrf.mxu0
      %972 = vdwg.mxu0
      %v973 = vmax.f32 %v847, 0.0
      %v974 = vmax.f32 %v850, 0.0
      %v975 = vmax.f32 %v855, 0.0
      %v976 = vmax.f32 %v858, 0.0
      %v977 = vmax.f32 %v863, 0.0
      %v978 = vmax.f32 %v866, 0.0
      %v979 = vmax.f32 %v871, 0.0
      %v980 = vmax.f32 %v874, 0.0
      %v981 = vmax.f32 %v879, 0.0
      %v982 = vmax.f32 %v882, 0.0
      %v983 = vmax.f32 %v887, 0.0
      %v984 = vmax.f32 %v890, 0.0
      %v985 = vmax.f32 %v895, 0.0
      %v986 = vmax.f32 %v898, 0.0
      %v987 = vmax.f32 %v903, 0.0
      %v988 = vmax.f32 %v906, 0.0
      %v989 = vmax.f32 %v911, 0.0
      %v990 = vmax.f32 %v914, 0.0
      %v991 = vmax.f32 %v919, 0.0
      %v992 = vmax.f32 %v922, 0.0
      %v993 = vmax.f32 %v927, 0.0
      %v994 = vmax.f32 %v930, 0.0
      %v995 = vmax.f32 %v935, 0.0
      %v996 = vmax.f32 %v938, 0.0
      %v997 = vmax.f32 %v943, 0.0
      %v998 = vmax.f32 %v946, 0.0
      %v999 = vmax.f32 %v951, 0.0
      %v1000 = vmax.f32 %v954, 0.0
      %v1001 = vmax.f32 %v959, 0.0
      %v1002 = vmax.f32 %v962, 0.0
      %v1003 = vmax.f32 %v967, 0.0
      %v1004 = vmax.f32 %v970, 0.0
      %v1005 = vpack.c.bf16 %v974, %v973
      %v1006 = vpack.c.bf16 %v976, %v975
      %v1007 = vpack.c.bf16 %v978, %v977
      %v1008 = vpack.c.bf16 %v980, %v979
      %v1009 = vpack.c.bf16 %v982, %v981
      %v1010 = vpack.c.bf16 %v984, %v983
      %v1011 = vpack.c.bf16 %v986, %v985
      %v1012 = vpack.c.bf16 %v988, %v987
      %v1013 = vpack.c.bf16 %v990, %v989
      %v1014 = vpack.c.bf16 %v992, %v991
      %v1015 = vpack.c.bf16 %v994, %v993
      %v1016 = vpack.c.bf16 %v996, %v995
      %v1017 = vpack.c.bf16 %v998, %v997
      %v1018 = vpack.c.bf16 %v1000, %v999
      %v1019 = vpack.c.bf16 %v1002, %v1001
      %v1020 = vpack.c.bf16 %v1004, %v1003
      %v1021 = vld [vmem:[#allocation9] sm:$0xf]
      %v1022 = vld [vmem:[#allocation9 + $0x4] sm:$0xf]
      %v1023 = vld [vmem:[#allocation9 + $0x8] sm:$0xf]
      %v1024 = vld [vmem:[#allocation9 + $0xc] sm:$0xf]
      %v1025 = vld [vmem:[#allocation9 + $0x10] sm:$0xf]
      %v1026 = vld [vmem:[#allocation9 + $0x14] sm:$0xf]
      %v1027 = vld [vmem:[#allocation9 + $0x18] sm:$0xf]
      %v1028 = vld [vmem:[#allocation9 + $0x1c] sm:$0xf]
      %v1029 = vld [vmem:[#allocation9 + $0x20] sm:$0xf]
      %v1030 = vld [vmem:[#allocation9 + $0x24] sm:$0xf]
      %v1031 = vld [vmem:[#allocation9 + $0x28] sm:$0xf]
      %v1032 = vld [vmem:[#allocation9 + $0x2c] sm:$0xf]
      %v1033 = vld [vmem:[#allocation9 + $0x30] sm:$0xf]
      %v1034 = vld [vmem:[#allocation9 + $0x34] sm:$0xf]
      %v1035 = vld [vmem:[#allocation9 + $0x38] sm:$0xf]
      %v1036 = vld [vmem:[#allocation9 + $0x3c] sm:$0xf]
      %v1053 = vunpack.c.l.b16 %v1021
      %v1054 = vunpack.c.l.b16 %v1022
      %v1055 = vunpack.c.l.b16 %v1023
      %v1056 = vunpack.c.l.b16 %v1024
      %v1057 = vunpack.c.l.b16 %v1025
      %v1058 = vunpack.c.l.b16 %v1026
      %v1059 = vunpack.c.l.b16 %v1027
      %v1060 = vunpack.c.l.b16 %v1028
      %v1061 = vunpack.c.l.b16 %v1029
      %v1062 = vunpack.c.l.b16 %v1030
      %v1063 = vunpack.c.l.b16 %v1031
      %v1064 = vunpack.c.l.b16 %v1032
      %v1065 = vunpack.c.l.b16 %v1033
      %v1066 = vunpack.c.l.b16 %v1034
      %v1067 = vunpack.c.l.b16 %v1035
      %v1068 = vunpack.c.l.b16 %v1036
      %v1069 = vpack.c.b16 %v1054, %v1053
      %v1070 = vpack.c.b16 %v1056, %v1055
      %v1071 = vpack.c.b16 %v1058, %v1057
      %v1072 = vpack.c.b16 %v1060, %v1059
      %v1073 = vpack.c.b16 %v1062, %v1061
      %v1074 = vpack.c.b16 %v1064, %v1063
      %v1075 = vpack.c.b16 %v1066, %v1065
      %v1076 = vpack.c.b16 %v1068, %v1067
      %1085 = vmatprep.subr.bf16.mxu0 0
      %1086 = vmatpush1.bf16.msra.mxu0 %v1076
      %1087 = vmatprep.subr.bf16.mxu0 0
      %1088 = vmatpush1.bf16.msra.mxu0 %v1075
      %1089 = vmatprep.subr.bf16.mxu0 0
      %1090 = vmatpush1.bf16.msra.mxu0 %v1074
      %1091 = vmatprep.subr.bf16.mxu0 0
      %1092 = vmatpush1.bf16.msra.mxu0 %v1073
      %1093 = vmatprep.subr.bf16.mxu0 0
      %1094 = vmatpush1.bf16.msra.mxu0 %v1072
      %1095 = vmatprep.subr.bf16.mxu0 0
      %1096 = vmatpush1.bf16.msra.mxu0 %v1071
      %1097 = vmatprep.subr.bf16.mxu0 0
      %1098 = vmatpush1.bf16.msra.mxu0 %v1070
      %1099 = vmatprep.subr.bf16.mxu0 0
      %1100 = vmatpush1.bf16.msra.mxu0 %v1069
      %1101 = vmatprep.subr.bf16.mxu0 0
      %1102 = vmatpush2.bf16.msra.mxu0 0
      %1103 = vmatprep.subr.bf16.mxu0 0
      %1104 = vmatpush2.bf16.msra.mxu0 0
      %1105 = vmatprep.subr.bf16.mxu0 0
      %1106 = vmatpush2.bf16.msra.mxu0 0
      %1107 = vmatprep.subr.bf16.mxu0 0
      %1108 = vmatpush2.bf16.msra.mxu0 0
      %1109 = vmatprep.subr.bf16.mxu0 0
      %1110 = vmatpush2.bf16.msra.mxu0 0
      %1111 = vmatprep.subr.bf16.mxu0 0
      %1112 = vmatpush2.bf16.msra.mxu0 0
      %1113 = vmatprep.subr.bf16.mxu0 0
      %1114 = vmatpush2.bf16.msra.mxu0 0
      %1115 = vmatprep.subr.bf16.mxu0 0
      %1116 = vmatpush2.bf16.msra.mxu0 0
      %1117 = vmatprep.mubr.bf16.mxu0 0
      %1118 = vmatmul.mubr.bf16.gmra.mxu0 %v1005
      %v1119 = vpop.f32.mrf.mxu0
      %v1120 = vadd.f32 0.0, %v1119
      %v1121 = vpop.f32.mrf.mxu0
      %v1122 = vpop.f32.mrf.mxu0
      %v1123 = vadd.f32 0.0, %v1122
      %v1124 = vpop.f32.mrf.mxu0
      %1125 = vmatprep.mubr.bf16.mxu0 0
      %1126 = vmatmul.mubr.bf16.gmra.mxu0 %v1006
      %v1127 = vpop.f32.mrf.mxu0
      %v1128 = vadd.f32 0.0, %v1127
      %v1129 = vpop.f32.mrf.mxu0
      %v1130 = vpop.f32.mrf.mxu0
      %v1131 = vadd.f32 0.0, %v1130
      %v1132 = vpop.f32.mrf.mxu0
      %1133 = vmatprep.mubr.bf16.mxu0 0
      %1134 = vmatmul.mubr.bf16.gmra.mxu0 %v1007
      %v1135 = vpop.f32.mrf.mxu0
      %v1136 = vadd.f32 0.0, %v1135
      %v1137 = vpop.f32.mrf.mxu0
      %v1138 = vpop.f32.mrf.mxu0
      %v1139 = vadd.f32 0.0, %v1138
      %v1140 = vpop.f32.mrf.mxu0
      %1141 = vmatprep.mubr.bf16.mxu0 0
      %1142 = vmatmul.mubr.bf16.gmra.mxu0 %v1008
      %v1143 = vpop.f32.mrf.mxu0
      %v1144 = vadd.f32 0.0, %v1143
      %v1145 = vpop.f32.mrf.mxu0
      %v1146 = vpop.f32.mrf.mxu0
      %v1147 = vadd.f32 0.0, %v1146
      %v1148 = vpop.f32.mrf.mxu0
      %1149 = vmatprep.mubr.bf16.mxu0 0
      %1150 = vmatmul.mubr.bf16.gmra.mxu0 %v1009
      %v1151 = vpop.f32.mrf.mxu0
      %v1152 = vadd.f32 0.0, %v1151
      %v1153 = vpop.f32.mrf.mxu0
      %v1154 = vpop.f32.mrf.mxu0
      %v1155 = vadd.f32 0.0, %v1154
      %v1156 = vpop.f32.mrf.mxu0
      %1157 = vmatprep.mubr.bf16.mxu0 0
      %1158 = vmatmul.mubr.bf16.gmra.mxu0 %v1010
      %v1159 = vpop.f32.mrf.mxu0
      %v1160 = vadd.f32 0.0, %v1159
      %v1161 = vpop.f32.mrf.mxu0
      %v1162 = vpop.f32.mrf.mxu0
      %v1163 = vadd.f32 0.0, %v1162
      %v1164 = vpop.f32.mrf.mxu0
      %1165 = vmatprep.mubr.bf16.mxu0 0
      %1166 = vmatmul.mubr.bf16.gmra.mxu0 %v1011
      %v1167 = vpop.f32.mrf.mxu0
      %v1168 = vadd.f32 0.0, %v1167
      %v1169 = vpop.f32.mrf.mxu0
      %v1170 = vpop.f32.mrf.mxu0
      %v1171 = vadd.f32 0.0, %v1170
      %v1172 = vpop.f32.mrf.mxu0
      %1173 = vmatprep.mubr.bf16.mxu0 0
      %1174 = vmatmul.mubr.bf16.gmra.mxu0 %v1012
      %v1175 = vpop.f32.mrf.mxu0
      %v1176 = vadd.f32 0.0, %v1175
      %v1177 = vpop.f32.mrf.mxu0
      %v1178 = vpop.f32.mrf.mxu0
      %v1179 = vadd.f32 0.0, %v1178
      %v1180 = vpop.f32.mrf.mxu0
      %1181 = vmatprep.mubr.bf16.mxu0 0
      %1182 = vmatmul.mubr.bf16.gmra.mxu0 %v1013
      %v1183 = vpop.f32.mrf.mxu0
      %v1184 = vadd.f32 0.0, %v1183
      %v1185 = vpop.f32.mrf.mxu0
      %v1186 = vpop.f32.mrf.mxu0
      %v1187 = vadd.f32 0.0, %v1186
      %v1188 = vpop.f32.mrf.mxu0
      %1189 = vmatprep.mubr.bf16.mxu0 0
      %1190 = vmatmul.mubr.bf16.gmra.mxu0 %v1014
      %v1191 = vpop.f32.mrf.mxu0
      %v1192 = vadd.f32 0.0, %v1191
      %v1193 = vpop.f32.mrf.mxu0
      %v1194 = vpop.f32.mrf.mxu0
      %v1195 = vadd.f32 0.0, %v1194
      %v1196 = vpop.f32.mrf.mxu0
      %1197 = vmatprep.mubr.bf16.mxu0 0
      %1198 = vmatmul.mubr.bf16.gmra.mxu0 %v1015
      %v1199 = vpop.f32.mrf.mxu0
      %v1200 = vadd.f32 0.0, %v1199
      %v1201 = vpop.f32.mrf.mxu0
      %v1202 = vpop.f32.mrf.mxu0
      %v1203 = vadd.f32 0.0, %v1202
      %v1204 = vpop.f32.mrf.mxu0
      %1205 = vmatprep.mubr.bf16.mxu0 0
      %1206 = vmatmul.mubr.bf16.gmra.mxu0 %v1016
      %v1207 = vpop.f32.mrf.mxu0
      %v1208 = vadd.f32 0.0, %v1207
      %v1209 = vpop.f32.mrf.mxu0
      %v1210 = vpop.f32.mrf.mxu0
      %v1211 = vadd.f32 0.0, %v1210
      %v1212 = vpop.f32.mrf.mxu0
      %1213 = vmatprep.mubr.bf16.mxu0 0
      %1214 = vmatmul.mubr.bf16.gmra.mxu0 %v1017
      %v1215 = vpop.f32.mrf.mxu0
      %v1216 = vadd.f32 0.0, %v1215
      %v1217 = vpop.f32.mrf.mxu0
      %v1218 = vpop.f32.mrf.mxu0
      %v1219 = vadd.f32 0.0, %v1218
      %v1220 = vpop.f32.mrf.mxu0
      %1221 = vmatprep.mubr.bf16.mxu0 0
      %1222 = vmatmul.mubr.bf16.gmra.mxu0 %v1018
      %v1223 = vpop.f32.mrf.mxu0
      %v1224 = vadd.f32 0.0, %v1223
      %v1225 = vpop.f32.mrf.mxu0
      %v1226 = vpop.f32.mrf.mxu0
      %v1227 = vadd.f32 0.0, %v1226
      %v1228 = vpop.f32.mrf.mxu0
      %1229 = vmatprep.mubr.bf16.mxu0 0
      %1230 = vmatmul.mubr.bf16.gmra.mxu0 %v1019
      %v1231 = vpop.f32.mrf.mxu0
      %v1232 = vadd.f32 0.0, %v1231
      %v1233 = vpop.f32.mrf.mxu0
      %v1234 = vpop.f32.mrf.mxu0
      %v1235 = vadd.f32 0.0, %v1234
      %v1236 = vpop.f32.mrf.mxu0
      %1237 = vmatprep.mubr.bf16.mxu0 0
      %1238 = vmatmul.mubr.bf16.gmra.mxu0 %v1020
      %v1239 = vpop.f32.mrf.mxu0
      %v1240 = vadd.f32 0.0, %v1239
      %v1241 = vpop.f32.mrf.mxu0
      %v1242 = vpop.f32.mrf.mxu0
      %v1243 = vadd.f32 0.0, %v1242
      %v1244 = vpop.f32.mrf.mxu0
      %1245 = vdwg.mxu0
      %v1246 = vpack.c.bf16 %v1123, %v1120
      %v1247 = vpack.c.bf16 %v1131, %v1128
      %v1248 = vpack.c.bf16 %v1139, %v1136
      %v1249 = vpack.c.bf16 %v1147, %v1144
      %v1250 = vpack.c.bf16 %v1155, %v1152
      %v1251 = vpack.c.bf16 %v1163, %v1160
      %v1252 = vpack.c.bf16 %v1171, %v1168
      %v1253 = vpack.c.bf16 %v1179, %v1176
      %v1254 = vpack.c.bf16 %v1187, %v1184
      %v1255 = vpack.c.bf16 %v1195, %v1192
      %v1256 = vpack.c.bf16 %v1203, %v1200
      %v1257 = vpack.c.bf16 %v1211, %v1208
      %v1258 = vpack.c.bf16 %v1219, %v1216
      %v1259 = vpack.c.bf16 %v1227, %v1224
      %v1260 = vpack.c.bf16 %v1235, %v1232
      %v1261 = vpack.c.bf16 %v1243, %v1240
      %v1278 = vunpack.c.l.b16 %v1246
      %v1279 = vunpack.c.h.b16 %v1246
      %v1280 = vunpack.c.l.b16 %v1247
      %v1281 = vunpack.c.h.b16 %v1247
      %v1282 = vunpack.c.l.b16 %v1248
      %v1283 = vunpack.c.h.b16 %v1248
      %v1284 = vunpack.c.l.b16 %v1249
      %v1285 = vunpack.c.h.b16 %v1249
      %v1286 = vunpack.c.l.b16 %v1250
      %v1287 = vunpack.c.h.b16 %v1250
      %v1288 = vunpack.c.l.b16 %v1251
      %v1289 = vunpack.c.h.b16 %v1251
      %v1290 = vunpack.c.l.b16 %v1252
      %v1291 = vunpack.c.h.b16 %v1252
      %v1292 = vunpack.c.l.b16 %v1253
      %v1293 = vunpack.c.h.b16 %v1253
      %v1294 = vunpack.c.l.b16 %v1254
      %v1295 = vunpack.c.h.b16 %v1254
      %v1296 = vunpack.c.l.b16 %v1255
      %v1297 = vunpack.c.h.b16 %v1255
      %v1298 = vunpack.c.l.b16 %v1256
      %v1299 = vunpack.c.h.b16 %v1256
      %v1300 = vunpack.c.l.b16 %v1257
      %v1301 = vunpack.c.h.b16 %v1257
      %v1302 = vunpack.c.l.b16 %v1258
      %v1303 = vunpack.c.h.b16 %v1258
      %v1304 = vunpack.c.l.b16 %v1259
      %v1305 = vunpack.c.h.b16 %v1259
      %v1306 = vunpack.c.l.b16 %v1260
      %v1307 = vunpack.c.h.b16 %v1260
      %v1308 = vunpack.c.l.b16 %v1261
      %v1309 = vunpack.c.h.b16 %v1261
      %v1310 = vpack.c.b16 %v1278, %v1278
      %v1311 = vpack.c.b16 %v1279, %v1279
      %v1312 = vpack.c.b16 %v1280, %v1280
      %v1313 = vpack.c.b16 %v1281, %v1281
      %v1314 = vpack.c.b16 %v1282, %v1282
      %v1315 = vpack.c.b16 %v1283, %v1283
      %v1316 = vpack.c.b16 %v1284, %v1284
      %v1317 = vpack.c.b16 %v1285, %v1285
      %v1318 = vpack.c.b16 %v1286, %v1286
      %v1319 = vpack.c.b16 %v1287, %v1287
      %v1320 = vpack.c.b16 %v1288, %v1288
      %v1321 = vpack.c.b16 %v1289, %v1289
      %v1322 = vpack.c.b16 %v1290, %v1290
      %v1323 = vpack.c.b16 %v1291, %v1291
      %v1324 = vpack.c.b16 %v1292, %v1292
      %v1325 = vpack.c.b16 %v1293, %v1293
      %v1326 = vpack.c.b16 %v1294, %v1294
      %v1327 = vpack.c.b16 %v1295, %v1295
      %v1328 = vpack.c.b16 %v1296, %v1296
      %v1329 = vpack.c.b16 %v1297, %v1297
      %v1330 = vpack.c.b16 %v1298, %v1298
      %v1331 = vpack.c.b16 %v1299, %v1299
      %v1332 = vpack.c.b16 %v1300, %v1300
      %v1333 = vpack.c.b16 %v1301, %v1301
      %v1334 = vpack.c.b16 %v1302, %v1302
      %v1335 = vpack.c.b16 %v1303, %v1303
      %v1336 = vpack.c.b16 %v1304, %v1304
      %v1337 = vpack.c.b16 %v1305, %v1305
      %v1338 = vpack.c.b16 %v1306, %v1306
      %v1339 = vpack.c.b16 %v1307, %v1307
      %v1340 = vpack.c.b16 %v1308, %v1308
      %v1341 = vpack.c.b16 %v1309, %v1309
      %1374 = vst [vmem:[#allocation11] sm:$0xf] %v1310
      %1375 = vst [vmem:[#allocation11 + $0x4] sm:$0xf] %v1311
      %1376 = vst [vmem:[#allocation11 + $0x8] sm:$0xf] %v1312
      %1377 = vst [vmem:[#allocation11 + $0xc] sm:$0xf] %v1313
      %1378 = vst [vmem:[#allocation11 + $0x10] sm:$0xf] %v1314
      %1379 = vst [vmem:[#allocation11 + $0x14] sm:$0xf] %v1315
      %1380 = vst [vmem:[#allocation11 + $0x18] sm:$0xf] %v1316
      %1381 = vst [vmem:[#allocation11 + $0x1c] sm:$0xf] %v1317
      %1382 = vst [vmem:[#allocation11 + $0x20] sm:$0xf] %v1318
      %1383 = vst [vmem:[#allocation11 + $0x24] sm:$0xf] %v1319
      %1384 = vst [vmem:[#allocation11 + $0x28] sm:$0xf] %v1320
      %1385 = vst [vmem:[#allocation11 + $0x2c] sm:$0xf] %v1321
      %1386 = vst [vmem:[#allocation11 + $0x30] sm:$0xf] %v1322
      %1387 = vst [vmem:[#allocation11 + $0x34] sm:$0xf] %v1323
      %1388 = vst [vmem:[#allocation11 + $0x38] sm:$0xf] %v1324
      %1389 = vst [vmem:[#allocation11 + $0x3c] sm:$0xf] %v1325
      %1390 = vst [vmem:[#allocation11 + $0x40] sm:$0xf] %v1326
      %1391 = vst [vmem:[#allocation11 + $0x44] sm:$0xf] %v1327
      %1392 = vst [vmem:[#allocation11 + $0x48] sm:$0xf] %v1328
      %1393 = vst [vmem:[#allocation11 + $0x4c] sm:$0xf] %v1329
      %1394 = vst [vmem:[#allocation11 + $0x50] sm:$0xf] %v1330
      %1395 = vst [vmem:[#allocation11 + $0x54] sm:$0xf] %v1331
      %1396 = vst [vmem:[#allocation11 + $0x58] sm:$0xf] %v1332
      %1397 = vst [vmem:[#allocation11 + $0x5c] sm:$0xf] %v1333
      %1398 = vst [vmem:[#allocation11 + $0x60] sm:$0xf] %v1334
      %1399 = vst [vmem:[#allocation11 + $0x64] sm:$0xf] %v1335
      %1400 = vst [vmem:[#allocation11 + $0x68] sm:$0xf] %v1336
      %1401 = vst [vmem:[#allocation11 + $0x6c] sm:$0xf] %v1337
      %1402 = vst [vmem:[#allocation11 + $0x70] sm:$0xf] %v1338
      %1403 = vst [vmem:[#allocation11 + $0x74] sm:$0xf] %v1339
      %1404 = vst [vmem:[#allocation11 + $0x78] sm:$0xf] %v1340
      %1405 = vst [vmem:[#allocation11 + $0x7c] sm:$0xf] %v1341
    $region45: #{tpu_custom_call.1} parent=1 // pred_fallthru
      _
    // Predicated region
    $region46: #{tpu_custom_call.1} parent=1 // pred_check
      _
    $region47: #{tpu_custom_call.1} parent=1 // pred_check_branch
      %1407 = sbr.rel (0) target = $region49
    $region48: #{tpu_custom_call.1} parent=1 // pred_region
      %s1409 = ssub.s32 2048, 2048
      %1410 = vsyncadd [#allocation5], %s1409
      %s1411 = sshll.u32 [#allocation11], 4
      %s1412 = int_to_ptr.vmem [resolvable:$true] %s1411
      %1417 = dma.vmem_to_hbm [thread:$0]  %s1412, 2048, %s5, [#allocation5], 64, 64, 4
    $region49: #{tpu_custom_call.1} parent=1 // pred_fallthru
      _
    // Predicated region
    $region50: #{tpu_custom_call.1} parent=1 // pred_check
      _
    $region51: #{tpu_custom_call.1} parent=1 // pred_check_branch
      %1419 = sbr.rel (0) target = $region53
    $region52: #{tpu_custom_call.1} parent=1 // pred_region
      %1420 = dma.done [#allocation5], 2048
    $region53: #{tpu_custom_call.1} parent=1 // pred_fallthru
      _
    %1421 = vsyncpa [#allocation4], 1
    %1422 = vsyncpa [#allocation7], 1
    %1423 = vsyncpa [#allocation10], 1
    %1424 = vsyncpa [#allocation5], 1

</llo_original>
